<compile_context>
chip_gen: v6e
topology: v6e:2x2x1
jax: 0.10.0
libtpu: 0.0.40
codegen_flags: <defaults>
</compile_context>

<pallas_src>
import math
import functools

import jax
import jax.numpy as jnp
from jax.experimental import pallas as pl
from jax.experimental.pallas import tpu as pltpu


def _mean_corr_kernel(q_ref, krev_ref, out_ref, *, inv_R, precision):
    # q_ref, krev_ref: (L, R) tiles for one batch element (R = H*E), input dtype.
    # Gram against the pre-reversed keys (one MXU matmul):
    #   g[t, s] = sum_r q[t, r] * k[(L - s) % L, r]
    g = jax.lax.dot_general(
        q_ref[...], krev_ref[...], (((1,), (1,)), ((), ())),
        precision=precision,
        preferred_element_type=jnp.float32,
    )                                                              # (L, L) f32

    # Per-row circular shift on the XLU (row t rolled by t along lanes):
    #   h[t, j] = g[t, (j - t) % L] = sum_r q[t, r] * k[(t - j) % L, r]
    h = pltpu.roll(g, shift=0, axis=1, stride=1, stride_axis=0)

    # Sublane reduce over t: out[j] = mean over (head, channel) of corr at delay j,
    # identical to irfft(rfft(q) * conj(rfft(k)))[j] averaged over channels.
    out_ref[...] = jnp.sum(h, axis=0, keepdims=True) * inv_R       # (1, L)


def _delay_agg_kernel(lut_ref, v_ref, out_ref, *, precision):
    # lut_ref: (1, L) f32 -- softmaxed weights scattered at their delay positions.
    # v_ref  : (L, H*D) values tile (input dtype); out_ref: (L, H*D) values dtype.
    L = v_ref.shape[0]

    # Circulant weight matrix from the per-batch LUT:
    #   base[t, s] = lut[s]  --(per-row roll by t)-->  W[t, s] = lut[(s - t) mod L]
    base = jnp.broadcast_to(lut_ref[...], (L, L))                  # (L, L) f32
    w_mat = pltpu.roll(base, shift=0, axis=1, stride=1, stride_axis=0)
    w_mat = w_mat.astype(v_ref.dtype)        # bf16 fast path when values are bf16

    # out[t, :] = sum_s W[t, s] * v[s, :] = sum_i w_i * v[(t + d_i) % L, :]
    out = jax.lax.dot_general(
        w_mat, v_ref[...], (((1,), (0,)), ((), ())),
        precision=precision,
        preferred_element_type=jnp.float32,
    )
    out_ref[...] = out.astype(out_ref.dtype)


def _mxu_precision(dtype):
    # f32 operands keep exact multi-pass contraction (top-k stability vs. the FFT
    # reference); narrower dtypes take the native single-pass MXU path.
    return jax.lax.Precision.HIGHEST if dtype == jnp.float32 else None


def auto_attention_forward(queries, keys, values, *, factor=5):
    """Equivalent of Auto_Attention.forward (training branch). Returns (V, None)."""
    B, L, H, E = queries.shape
    _, S, _, D = values.shape

    # ---- glue: length alignment (same semantics as the torch forward) ----
    # (torch pads with E-wide zeros; identical whenever torch's own code would not
    #  crash, i.e. whenever E == D.)
    if L > S:
        zk = jnp.zeros((B, L - S, H, E), dtype=keys.dtype)
        zv = jnp.zeros((B, L - S, H, D), dtype=values.dtype)
        keys = jnp.concatenate([keys, zk], axis=1)
        values = jnp.concatenate([values, zv], axis=1)
    else:
        keys = keys[:, :L]
        values = values[:, :L]

    R = H * E
    HD = H * D
    q2d = queries.reshape(B, L, R)          # keep input dtype; no f32 upcast
    k2d = keys.reshape(B, L, R)
    v2d = values.reshape(B, L, HD)

    # Circular time reversal of keys (review item 1): k_rev[s] = k[(L - s) % L].
    k_rev = jnp.roll(jnp.flip(k2d, axis=1), shift=1, axis=1)

    prec_qk = _mxu_precision(q2d.dtype)
    prec_v = _mxu_precision(v2d.dtype)

    # ---- kernel 1: channel-mean circular autocorrelation, (B, L) only ----
    mean_corr = pl.pallas_call(
        functools.partial(_mean_corr_kernel, inv_R=1.0 / R, precision=prec_qk),
        grid=(B,),
        in_specs=[
            pl.BlockSpec((None, L, R), lambda b: (b, 0, 0)),
            pl.BlockSpec((None, L, R), lambda b: (b, 0, 0)),
        ],
        out_specs=pl.BlockSpec((None, 1, L), lambda b: (b, 0, 0)),
        out_shape=jax.ShapeDtypeStruct((B, 1, L), jnp.float32),
        compiler_params=pltpu.CompilerParams(dimension_semantics=("parallel",)),
    )(q2d, k_rev)
    mean_value = mean_corr[:, 0, :]                                   # (B, L)

    # ---- glue: tiny top-k delay selection + softmax over selected weights ----
    top_k = int(factor * math.log(L))
    index = jax.lax.top_k(jnp.mean(mean_value, axis=0), top_k)[1]     # (top_k,)
    weights = jnp.take(mean_value, index, axis=1)                     # (B, top_k)
    tmp_corr = jax.nn.softmax(weights, axis=-1)                       # (B, top_k)

    # Scatter the softmaxed weights into a per-batch length-L circulant LUT
    # (review item 2): lut[b, index[i]] = tmp_corr[b, i].
    lut = jnp.zeros((B, L), jnp.float32).at[:, index].add(
        tmp_corr.astype(jnp.float32))
    lut = lut.reshape(B, 1, L)

    # ---- kernel 2: time-delay aggregation as one strided roll + one MXU matmul ----
    agg = pl.pallas_call(
        functools.partial(_delay_agg_kernel, precision=prec_v),
        grid=(B,),
        in_specs=[
            pl.BlockSpec((None, 1, L), lambda b: (b, 0, 0)),    # per-batch LUT
            pl.BlockSpec((None, L, HD), lambda b: (b, 0, 0)),   # values
        ],
        out_specs=pl.BlockSpec((None, L, HD), lambda b: (b, 0, 0)),
        out_shape=jax.ShapeDtypeStruct((B, L, HD), values.dtype),
        compiler_params=pltpu.CompilerParams(dimension_semantics=("parallel",)),
    )(lut, v2d)

    V = agg.reshape(B, L, H, D)      # == torch delays_agg.permute(0, 3, 1, 2)
    return V, None                   # output_attention=False


def _reference(queries, keys, values, *, factor=5):
    """Pure-JAX (FFT-based) reference mirroring the torch forward (training path)."""
    B, L, H, E = queries.shape
    _, S, _, D = values.shape
    if L > S:
        zk = jnp.zeros((B, L - S, H, E), dtype=keys.dtype)
        zv = jnp.zeros((B, L - S, H, D), dtype=values.dtype)
        keys = jnp.concatenate([keys, zk], axis=1)
        values = jnp.concatenate([values, zv], axis=1)
    else:
        keys = keys[:, :L]
        values = values[:, :L]
    q = jnp.transpose(queries, (0, 2, 3, 1)).astype(jnp.float32)
    k = jnp.transpose(keys, (0, 2, 3, 1)).astype(jnp.float32)
    v = jnp.transpose(values, (0, 2, 3, 1)).astype(jnp.float32)
    qf = jnp.fft.rfft(q, axis=-1)
    kf = jnp.fft.rfft(k, axis=-1)
    corr = jnp.fft.irfft(qf * jnp.conj(kf), n=L, axis=-1)
    top_k = int(factor * math.log(L))
    mean_value = jnp.mean(jnp.mean(corr, axis=1), axis=1)             # (B, L)
    index = jax.lax.top_k(jnp.mean(mean_value, axis=0), top_k)[1]
    weights = jnp.take(mean_value, index, axis=1)
    tmp_corr = jax.nn.softmax(weights, axis=-1)
    delays_agg = jnp.zeros_like(v)
    for i in range(top_k):
        pattern = jnp.roll(v, -int(index[i]), axis=-1)
        delays_agg = delays_agg + pattern * tmp_corr[:, i][:, None, None, None]
    return jnp.transpose(delays_agg, (0, 3, 1, 2))                    # (B, L, H, D)


if __name__ == "__main__":
    # Small shapes consistent with forward: (B, L, H, E) / (B, S, H, D)
    B, L, S, H, E, D = 2, 128, 128, 4, 8, 8
    key = jax.random.PRNGKey(0)
    kq, kk, kv = jax.random.split(key, 3)
    queries = jax.random.normal(kq, (B, L, H, E), dtype=jnp.float32)
    keys = jax.random.normal(kk, (B, S, H, E), dtype=jnp.float32)
    values = jax.random.normal(kv, (B, S, H, D), dtype=jnp.float32)

    V, attn = auto_attention_forward(queries, keys, values, factor=5)
    V = jax.block_until_ready(V)

    V_ref = _reference(queries, keys, values, factor=5)
    assert V.shape == (B, L, H, D)
    assert attn is None
    assert bool(jnp.allclose(V.astype(jnp.float32), V_ref, atol=1e-2, rtol=1e-2))

    print("KERNEL_OK")
</pallas_src>

<mosaic_0001>
module attributes {stable_mosaic.version = 11 : i64} {
  func.func @_mean_corr_kernel(%arg0: i32, %arg1: memref<1x128x32xf32, #tpu.memory_space<vmem>>, %arg2: memref<1x128x32xf32, #tpu.memory_space<vmem>>, %arg3: memref<1x1x128xf32, #tpu.memory_space<vmem>>) attributes {dimension_semantics = [#tpu.dimension_semantics<parallel>], iteration_bounds = array<i64: 2>, scalar_prefetch = 0 : i64, scratch_operands = 0 : i64, tpu.core_type = #tpu.core_type<tc>, window_params = [{transform_indices = @transform_0, window_bounds = array<i64: 1, 128, 32>}, {transform_indices = @transform_1, window_bounds = array<i64: 1, 128, 32>}, {transform_indices = @transform_2, window_bounds = array<i64: 1, 1, 128>}]} {
    %c0 = arith.constant 0 : index
    %c0_0 = arith.constant 0 : index
    %c0_1 = arith.constant 0 : index
    %0 = vector.load %arg1[%c0, %c0_0, %c0_1] : memref<1x128x32xf32, #tpu.memory_space<vmem>>, vector<1x128x32xf32>
    %1 = vector.shape_cast %0 : vector<1x128x32xf32> to vector<128x32xf32>
    %c0_2 = arith.constant 0 : index
    %c0_3 = arith.constant 0 : index
    %c0_4 = arith.constant 0 : index
    %2 = vector.load %arg2[%c0_2, %c0_3, %c0_4] : memref<1x128x32xf32, #tpu.memory_space<vmem>>, vector<1x128x32xf32>
    %3 = vector.shape_cast %2 : vector<1x128x32xf32> to vector<128x32xf32>
    %cst = arith.constant dense<0.000000e+00> : vector<128x128xf32>
    %4 = tpu.matmul %1, %3, %cst {dimension_numbers = #tpu.dot_dimension_numbers<[1], [1], [0], [0], [0, 0, 1, 0], [], []>, precision = #tpu.contract_precision<fp32>} : vector<128x32xf32>, vector<128x32xf32>, vector<128x128xf32> -> vector<128x128xf32>
    %c0_i32 = arith.constant 0 : i32
    %5 = tpu.dynamic_rotate %4 by %c0_i32 dim 1 {stride = 1 : si32, stride_dimension = 0 : si32} : vector<128x128xf32>, i32 -> vector<128x128xf32>
    %cst_5 = arith.constant dense<0.000000e+00> : vector<128xf32>
    %6 = vector.multi_reduction <add>, %5, %cst_5 [0] : vector<128x128xf32> to vector<128xf32>
    %7 = vector.shape_cast %6 : vector<128xf32> to vector<1x128xf32>
    %cst_6 = arith.constant 3.125000e-02 : f32
    %8 = vector.broadcast %cst_6 : f32 to vector<1x128xf32>
    %9 = arith.mulf %7, %8 : vector<1x128xf32>
    %c0_7 = arith.constant 0 : index
    %c0_8 = arith.constant 0 : index
    %c0_9 = arith.constant 0 : index
    %10 = vector.load %arg3[%c0_7, %c0_8, %c0_9] : memref<1x1x128xf32, #tpu.memory_space<vmem>>, vector<1x1x128xf32>
    %11 = vector.shape_cast %10 : vector<1x1x128xf32> to vector<1x128xf32>
    %12 = vector.shape_cast %9 : vector<1x128xf32> to vector<1x1x128xf32>
    tpu.vector_store %arg3[%c0_7, %c0_8, %c0_9], %12 {strides = array<i32>} : memref<1x1x128xf32, #tpu.memory_space<vmem>>, vector<1x1x128xf32>,
    return
  }
  func.func @transform_0(%arg0: i32) -> (i32, i32, i32) {
    %c0_i32 = arith.constant 0 : i32
    %c0_i32_0 = arith.constant 0 : i32
    %c0_i32_1 = arith.constant 0 : i32
    return %arg0, %c0_i32, %c0_i32_0 : i32, i32, i32
  }
  func.func @transform_1(%arg0: i32) -> (i32, i32, i32) {
    %c0_i32 = arith.constant 0 : i32
    %c0_i32_0 = arith.constant 0 : i32
    %c0_i32_1 = arith.constant 0 : i32
    return %arg0, %c0_i32, %c0_i32_0 : i32, i32, i32
  }
  func.func @transform_2(%arg0: i32) -> (i32, i32, i32) {
    %c0_i32 = arith.constant 0 : i32
    %c0_i32_0 = arith.constant 0 : i32
    %c0_i32_1 = arith.constant 0 : i32
    return %arg0, %c0_i32, %c0_i32_0 : i32, i32, i32
  }
}

</mosaic_0001>

<llo_original>
// kernel: tpu_custom_call.1
$region0: #{tpu_custom_call.1}
  #allocation0 [shape = 'u32[]', space=smem, size = 0x4, offset = 0x4, fixed_abs, tag = 'smem constant byte address 0x4 - core index']
  #allocation1 [shape = 'u32[144,128]{1,0:T(1,128)}', space=vmem, size = 0x12000, scoped, tag = 'internal scratch']
  %s0 = inlined_call_operand.vmem [shape: f32[2,128,32], index: 0, kind: input, shape index: {}]
  %s1 = inlined_call_operand.vmem [shape: f32[2,128,32], index: 1, kind: input, shape index: {}]
  %s2 = inlined_call_operand.hbm [shape: f32[2,1,128], index: 2, kind: output, shape index: {}]
  %s3 = sld [smem:[#allocation0]]
  $region41: #{tpu_custom_call.1} parent=0
    _
  %s5 = ssub.s32 1, %s3
  %s6 = scalar_select 0, %s5, %s3
  $region1: #{tpu_custom_call.1} parent=0
    #allocation2 [shape = 'u8[1024]{0}', space=vmem, size = 0x400, scoped, tag = 'output window, operand 0']
    #allocation3 [shape = 's32[2]{0}', space=sflag, size = 0x8, scoped, tag = 'scoped memory for tpu_custom_call.1']
    %7 = vsyncpa [#allocation3], 0
    %s8 = scalar_lea.sflag [#allocation3], 1
    %9 = vsyncpa %s8, 0
    loop: start=0, step=1, limit=4
    $region2: #{tpu_custom_call.1} parent=1 // loop_pre_header
      _
    $region3: #{tpu_custom_call.1} parent=1 // loop_header
      %s11 = sphi 0, %s15
      %p12 = scmp.ge.s32.totalorder %s11, 4
      %s21 = sphi 0, %s23
      %s24 = sphi 0, %s21
      %s25 = sphi 0, %s24
      %s41 = sphi 0, %s25
      %s47 = sphi 0, %s49
      %s50 = sphi 0, %s47
      %s51 = sphi 0, %s50
      %s67 = sphi 0, %s51
      %s73 = sphi 0, %s75
      %s76 = sphi 0, %s73
      %s77 = sphi 0, %s76
      %s93 = sphi 0, %s77
    $region4: #{tpu_custom_call.1} parent=1 // loop_header_branch
      %14 = sbr.rel (%p12) target = $region8
    $region5: #{tpu_custom_call.1} parent=1 // loop_body
      %s16 = ssub.s32 %s11, 1
      %s17 = ssub.s32 %s11, 2
      %s18 = sadd.s32 %s11, 1
      %s19 = ssub.s32 %s11, %s18
      %p20 = scmp.eq.s32.totalorder %s19, 0
      %s22 = sadd.s32 %s21, 1
      %s23 = scalar_select %p20, %s21, %s22
      %p26 = pneg %p20
      %p27 = scmp.eq.s32.totalorder %s11, 1
      %p28 = por %p26, %p27
      %p29 = scmp.ne.s32.totalorder %s21, %s24
      %p30 = scmp.eq.s32.totalorder %s11, 0
      %p31 = por %p29, %p30
      %p32 = scmp.ne.s32.totalorder %s21, %s24
      %p33 = scmp.eq.s32.totalorder %s16, 1
      %p34 = por %p32, %p33
      %p35 = scmp.ne.s32.totalorder %s24, %s25
      %p36 = scmp.eq.s32.totalorder %s16, 0
      %p37 = por %p35, %p36
      %p38 = scmp.ne.s32.totalorder %s24, %s25
      %p39 = scmp.eq.s32.totalorder %s17, 1
      %p40 = por %p38, %p39
      %p42 = scmp.ne.s32.totalorder %s25, %s41
      %p43 = scmp.eq.s32.totalorder %s17, 0
      %p44 = por %p42, %p43
      %s45 = ssub.s32 %s11, %s18
      %p46 = scmp.eq.s32.totalorder %s45, 0
      %s48 = sadd.s32 %s47, 1
      %s49 = scalar_select %p46, %s47, %s48
      %p52 = pneg %p46
      %p53 = scmp.eq.s32.totalorder %s11, 1
      %p54 = por %p52, %p53
      %p55 = scmp.ne.s32.totalorder %s47, %s50
      %p56 = scmp.eq.s32.totalorder %s11, 0
      %p57 = por %p55, %p56
      %p58 = scmp.ne.s32.totalorder %s47, %s50
      %p59 = scmp.eq.s32.totalorder %s16, 1
      %p60 = por %p58, %p59
      %p61 = scmp.ne.s32.totalorder %s50, %s51
      %p62 = scmp.eq.s32.totalorder %s16, 0
      %p63 = por %p61, %p62
      %p64 = scmp.ne.s32.totalorder %s50, %s51
      %p65 = scmp.eq.s32.totalorder %s17, 1
      %p66 = por %p64, %p65
      %p68 = scmp.ne.s32.totalorder %s51, %s67
      %p69 = scmp.eq.s32.totalorder %s17, 0
      %p70 = por %p68, %p69
      %s71 = ssub.s32 %s11, %s18
      %p72 = scmp.eq.s32.totalorder %s71, 0
      %s74 = sadd.s32 %s73, 1
      %s75 = scalar_select %p72, %s73, %s74
      %p78 = pneg %p72
      %p79 = scmp.eq.s32.totalorder %s11, 1
      %p80 = por %p78, %p79
      %p81 = scmp.ne.s32.totalorder %s73, %s76
      %p82 = scmp.eq.s32.totalorder %s11, 0
      %p83 = por %p81, %p82
      %p84 = scmp.ne.s32.totalorder %s73, %s76
      %p85 = scmp.eq.s32.totalorder %s16, 1
      %p86 = por %p84, %p85
      %p87 = scmp.ne.s32.totalorder %s76, %s77
      %p88 = scmp.eq.s32.totalorder %s16, 0
      %p89 = por %p87, %p88
      %p90 = scmp.ne.s32.totalorder %s76, %s77
      %p91 = scmp.eq.s32.totalorder %s17, 1
      %p92 = por %p90, %p91
      %p94 = scmp.ne.s32.totalorder %s77, %s93
      %p95 = scmp.eq.s32.totalorder %s17, 0
      %p96 = por %p94, %p95
      %p97 = scmp.le.s32.totalorder 1, %s11
      %p98 = scmp.lt.s32.totalorder %s11, 3
      %p99 = pnand %p97, %p98
      %p100 = pneg %p99
      // Predicated region
      $region9: #{tpu_custom_call.1} parent=5 // pred_check
        _
      $region10: #{tpu_custom_call.1} parent=5 // pred_check_branch
        %102 = sbr.rel (%p99) target = $region12
      $region11: #{tpu_custom_call.1} parent=5 // pred_region
        %s103 = ssub.s32 %s11, 1
      $region12: #{tpu_custom_call.1} parent=5 // pred_fallthru
        _
      %p104 = scmp.lt.s32.totalorder %s11, 2
      // Predicated region
      $region13: #{tpu_custom_call.1} parent=5 // pred_check
        %p105 = pneg %p104
      $region14: #{tpu_custom_call.1} parent=5 // pred_check_branch
        %107 = sbr.rel (%p105) target = $region16
      $region15: #{tpu_custom_call.1} parent=5 // pred_region
        // Predicated region
        $region17: #{tpu_custom_call.1} parent=15 // pred_check
          %p108 = pneg %p31
        $region18: #{tpu_custom_call.1} parent=15 // pred_check_branch
          %110 = sbr.rel (%p108) target = $region20
        $region19: #{tpu_custom_call.1} parent=15 // pred_region
          %p111 = scmp.lt.s32.totalorder %s11, 1
          %s112 = scalar_select %p111, %s11, 1
          %s113 = smul.addr %s112, 16
          %s114 = smul.addr %s113, 8
          %s115 = scalar_lea.vmem %s0, %s114
        $region20: #{tpu_custom_call.1} parent=15 // pred_fallthru
          _
        // Predicated region
        $region21: #{tpu_custom_call.1} parent=15 // pred_check
          %p116 = pneg %p57
        $region22: #{tpu_custom_call.1} parent=15 // pred_check_branch
          %118 = sbr.rel (%p116) target = $region24
        $region23: #{tpu_custom_call.1} parent=15 // pred_region
          %p119 = scmp.lt.s32.totalorder %s11, 1
          %s120 = scalar_select %p119, %s11, 1
          %s121 = smul.addr %s120, 16
          %s122 = smul.addr %s121, 8
          %s123 = scalar_lea.vmem %s1, %s122
        $region24: #{tpu_custom_call.1} parent=15 // pred_fallthru
          _
      $region16: #{tpu_custom_call.1} parent=5 // pred_fallthru
        _
      %p124 = scmp.le.s32.totalorder 1, %s11
      %p125 = scmp.lt.s32.totalorder %s11, 3
      %p126 = pnand %p124, %p125
      %p127 = pneg %p126
      // Predicated region
      $region25: #{tpu_custom_call.1} parent=5 // pred_check
        _
      $region26: #{tpu_custom_call.1} parent=5 // pred_check_branch
        %129 = sbr.rel (%p126) target = $region28
      $region27: #{tpu_custom_call.1} parent=5 // pred_region
        %s130 = ssub.s32 %s11, 1
        %p131 = scmp.lt.s32.totalorder %s16, 1
        %s132 = scalar_select %p131, %s16, 1
        %s133 = smul.addr %s132, 16
        %s134 = smul.addr %s133, 8
        %s135 = scalar_lea.vmem %s0, %s134
        %p136 = pneg %p37
        %p137 = pneg %p34
        %p138 = scmp.lt.s32.totalorder %s16, 1
        %s139 = scalar_select %p138, %s16, 1
        %s140 = smul.addr %s139, 16
        %s141 = smul.addr %s140, 8
        %s142 = scalar_lea.vmem %s1, %s141
        %p143 = pneg %p63
        %p144 = pneg %p60
        %p145 = pneg %p89
        %p146 = pneg %p86
        %s147 = sand.u32 %s76, 1
        %s148 = scalar_lea.sflag [#allocation3], %s147
        %s149 = sand.u32 %s76, 1
        %s150 = scalar_lea.vmem [#allocation2], %s149
        %p151 = scmp.lt.s32.totalorder %s16, 1
        %s152 = scalar_select %p151, %s16, 1
        %s153 = smul.addr %s152, 16
        %s154 = smul.addr %s153, 8
        %s155 = scalar_lea.vmem %s0, %s154
        %p156 = scmp.lt.s32.totalorder %s16, 1
        %s157 = scalar_select %p156, %s16, 1
        %s158 = smul.addr %s157, 16
        %s159 = smul.addr %s158, 8
        %s160 = scalar_lea.vmem %s1, %s159
        %v161 = vld [vmem:[%s155] sm:$0xff]
        %v162 = vld [vmem:[%s155 + $0x8] sm:$0xff]
        %v163 = vld [vmem:[%s155 + $0x10] sm:$0xff]
        %v164 = vld [vmem:[%s155 + $0x18] sm:$0xff]
        %v165 = vld [vmem:[%s155 + $0x20] sm:$0xff]
        %v166 = vld [vmem:[%s155 + $0x28] sm:$0xff]
        %v167 = vld [vmem:[%s155 + $0x30] sm:$0xff]
        %v168 = vld [vmem:[%s155 + $0x38] sm:$0xff]
        %v169 = vld [vmem:[%s155 + $0x40] sm:$0xff]
        %v170 = vld [vmem:[%s155 + $0x48] sm:$0xff]
        %v171 = vld [vmem:[%s155 + $0x50] sm:$0xff]
        %v172 = vld [vmem:[%s155 + $0x58] sm:$0xff]
        %v173 = vld [vmem:[%s155 + $0x60] sm:$0xff]
        %v174 = vld [vmem:[%s155 + $0x68] sm:$0xff]
        %v175 = vld [vmem:[%s155 + $0x70] sm:$0xff]
        %v176 = vld [vmem:[%s155 + $0x78] sm:$0xff]
        %v177 = vld [vmem:[%s160] sm:$0xff]
        %v178 = vld [vmem:[%s160 + $0x8] sm:$0xff]
        %v179 = vld [vmem:[%s160 + $0x10] sm:$0xff]
        %v180 = vld [vmem:[%s160 + $0x18] sm:$0xff]
        %v181 = vld [vmem:[%s160 + $0x20] sm:$0xff]
        %v182 = vld [vmem:[%s160 + $0x28] sm:$0xff]
        %v183 = vld [vmem:[%s160 + $0x30] sm:$0xff]
        %v184 = vld [vmem:[%s160 + $0x38] sm:$0xff]
        %v185 = vld [vmem:[%s160 + $0x40] sm:$0xff]
        %v186 = vld [vmem:[%s160 + $0x48] sm:$0xff]
        %v187 = vld [vmem:[%s160 + $0x50] sm:$0xff]
        %v188 = vld [vmem:[%s160 + $0x58] sm:$0xff]
        %v189 = vld [vmem:[%s160 + $0x60] sm:$0xff]
        %v190 = vld [vmem:[%s160 + $0x68] sm:$0xff]
        %v191 = vld [vmem:[%s160 + $0x70] sm:$0xff]
        %v192 = vld [vmem:[%s160 + $0x78] sm:$0xff]
        %vm193 = vcmask 261120
        %v195 = vsel %vm193, %v161, 0
        %v198 = vsel %vm193, %v162, 0
        %v201 = vsel %vm193, %v163, 0
        %v204 = vsel %vm193, %v164, 0
        %v207 = vsel %vm193, %v165, 0
        %v210 = vsel %vm193, %v166, 0
        %v213 = vsel %vm193, %v167, 0
        %v216 = vsel %vm193, %v168, 0
        %v219 = vsel %vm193, %v169, 0
        %v222 = vsel %vm193, %v170, 0
        %v225 = vsel %vm193, %v171, 0
        %v228 = vsel %vm193, %v172, 0
        %v231 = vsel %vm193, %v173, 0
        %v234 = vsel %vm193, %v174, 0
        %v237 = vsel %vm193, %v175, 0
        %v240 = vsel %vm193, %v176, 0
        %v243 = vsel %vm193, %v177, 0
        %v246 = vsel %vm193, %v178, 0
        %v249 = vsel %vm193, %v179, 0
        %v252 = vsel %vm193, %v180, 0
        %v255 = vsel %vm193, %v181, 0
        %v258 = vsel %vm193, %v182, 0
        %v261 = vsel %vm193, %v183, 0
        %v264 = vsel %vm193, %v184, 0
        %v267 = vsel %vm193, %v185, 0
        %v270 = vsel %vm193, %v186, 0
        %v273 = vsel %vm193, %v187, 0
        %v276 = vsel %vm193, %v188, 0
        %v279 = vsel %vm193, %v189, 0
        %v282 = vsel %vm193, %v190, 0
        %v285 = vsel %vm193, %v191, 0
        %v288 = vsel %vm193, %v192, 0
        %290 = vmatprep.subr.mxu0 0.0
        %v291 = vand.u32 %v288, 4294901760
        %292 = vmatpush1.xpose.msra.mxu0 %v291
        %293 = vmatprep.subr.mxu0 0.0
        %v294 = vand.u32 %v285, 4294901760
        %295 = vmatpush1.xpose.msra.mxu0 %v294
        %296 = vmatprep.subr.mxu0 0.0
        %v297 = vand.u32 %v282, 4294901760
        %298 = vmatpush1.xpose.msra.mxu0 %v297
        %299 = vmatprep.subr.mxu0 0.0
        %v300 = vand.u32 %v279, 4294901760
        %301 = vmatpush1.xpose.msra.mxu0 %v300
        %302 = vmatprep.subr.mxu0 0.0
        %v303 = vand.u32 %v276, 4294901760
        %304 = vmatpush1.xpose.msra.mxu0 %v303
        %305 = vmatprep.subr.mxu0 0.0
        %v306 = vand.u32 %v273, 4294901760
        %307 = vmatpush1.xpose.msra.mxu0 %v306
        %308 = vmatprep.subr.mxu0 0.0
        %v309 = vand.u32 %v270, 4294901760
        %310 = vmatpush1.xpose.msra.mxu0 %v309
        %311 = vmatprep.subr.mxu0 0.0
        %v312 = vand.u32 %v267, 4294901760
        %313 = vmatpush1.xpose.msra.mxu0 %v312
        %314 = vmatprep.subr.mxu0 0.0
        %v315 = vand.u32 %v264, 4294901760
        %316 = vmatpush1.xpose.msra.mxu0 %v315
        %317 = vmatprep.subr.mxu0 0.0
        %v318 = vand.u32 %v261, 4294901760
        %319 = vmatpush1.xpose.msra.mxu0 %v318
        %320 = vmatprep.subr.mxu0 0.0
        %v321 = vand.u32 %v258, 4294901760
        %322 = vmatpush1.xpose.msra.mxu0 %v321
        %323 = vmatprep.subr.mxu0 0.0
        %v324 = vand.u32 %v255, 4294901760
        %325 = vmatpush1.xpose.msra.mxu0 %v324
        %326 = vmatprep.subr.mxu0 0.0
        %v327 = vand.u32 %v252, 4294901760
        %328 = vmatpush1.xpose.msra.mxu0 %v327
        %329 = vmatprep.subr.mxu0 0.0
        %v330 = vand.u32 %v249, 4294901760
        %331 = vmatpush1.xpose.msra.mxu0 %v330
        %332 = vmatprep.subr.mxu0 0.0
        %v333 = vand.u32 %v246, 4294901760
        %334 = vmatpush1.xpose.msra.mxu0 %v333
        %335 = vmatprep.subr.mxu0 0.0
        %v336 = vand.u32 %v243, 4294901760
        %337 = vmatpush1.xpose.msra.mxu0 %v336
        %338 = vmatprep.subr.mxu0 0.0
        %339 = vmatpush2.xpose.msra.mxu0 0.0
        %340 = vmatprep.subr.mxu0 0.0
        %341 = vmatpush2.xpose.msra.mxu0 0.0
        %342 = vmatprep.subr.mxu0 0.0
        %343 = vmatpush2.xpose.msra.mxu0 0.0
        %344 = vmatprep.subr.mxu0 0.0
        %345 = vmatpush2.xpose.msra.mxu0 0.0
        %346 = vmatprep.subr.mxu0 0.0
        %347 = vmatpush2.xpose.msra.mxu0 0.0
        %348 = vmatprep.subr.mxu0 0.0
        %349 = vmatpush2.xpose.msra.mxu0 0.0
        %350 = vmatprep.subr.mxu0 0.0
        %351 = vmatpush2.xpose.msra.mxu0 0.0
        %352 = vmatprep.subr.mxu0 0.0
        %353 = vmatpush2.xpose.msra.mxu0 0.0
        %354 = vmatprep.subr.mxu0 0.0
        %355 = vmatpush2.xpose.msra.mxu0 0.0
        %356 = vmatprep.subr.mxu0 0.0
        %357 = vmatpush2.xpose.msra.mxu0 0.0
        %358 = vmatprep.subr.mxu0 0.0
        %359 = vmatpush2.xpose.msra.mxu0 0.0
        %360 = vmatprep.subr.mxu0 0.0
        %361 = vmatpush2.xpose.msra.mxu0 0.0
        %362 = vmatprep.subr.mxu0 0.0
        %363 = vmatpush2.xpose.msra.mxu0 0.0
        %364 = vmatprep.subr.mxu0 0.0
        %365 = vmatpush2.xpose.msra.mxu0 0.0
        %366 = vmatprep.subr.mxu0 0.0
        %367 = vmatpush2.xpose.msra.mxu0 0.0
        %368 = vmatprep.subr.mxu0 0.0
        %369 = vmatpush2.xpose.msra.mxu0 0.0
        %370 = vmatprep.mubr.f32.mxu0 0.0
        %v371 = vand.u32 %v195, 4294901760
        %v372 = vsub.f32 %v195, %v371
        %v373 = vand.u32 %v372, 4294901760
        %v374 = vsub.f32 %v372, %v373
        %v375 = vand.u32 %v374, 4294901760
        %376 = vmatmul.mubr.f32.gmra.mxu0 %v375
        %v377 = vpop.f32.mrf.mxu0
        %v378 = vadd.f32 0.0, %v377
        %v379 = vpop.f32.mrf.mxu0
        %380 = vmatprep.mubr.f32.mxu0 0.0
        %v381 = vand.u32 %v198, 4294901760
        %v382 = vsub.f32 %v198, %v381
        %v383 = vand.u32 %v382, 4294901760
        %v384 = vsub.f32 %v382, %v383
        %v385 = vand.u32 %v384, 4294901760
        %386 = vmatmul.mubr.f32.gmra.mxu0 %v385
        %v387 = vpop.f32.mrf.mxu0
        %v388 = vadd.f32 0.0, %v387
        %v389 = vpop.f32.mrf.mxu0
        %390 = vmatprep.mubr.f32.mxu0 0.0
        %v391 = vand.u32 %v201, 4294901760
        %v392 = vsub.f32 %v201, %v391
        %v393 = vand.u32 %v392, 4294901760
        %v394 = vsub.f32 %v392, %v393
        %v395 = vand.u32 %v394, 4294901760
        %396 = vmatmul.mubr.f32.gmra.mxu0 %v395
        %v397 = vpop.f32.mrf.mxu0
        %v398 = vadd.f32 0.0, %v397
        %v399 = vpop.f32.mrf.mxu0
        %400 = vmatprep.mubr.f32.mxu0 0.0
        %v401 = vand.u32 %v204, 4294901760
        %v402 = vsub.f32 %v204, %v401
        %v403 = vand.u32 %v402, 4294901760
        %v404 = vsub.f32 %v402, %v403
        %v405 = vand.u32 %v404, 4294901760
        %406 = vmatmul.mubr.f32.gmra.mxu0 %v405
        %v407 = vpop.f32.mrf.mxu0
        %v408 = vadd.f32 0.0, %v407
        %v409 = vpop.f32.mrf.mxu0
        %410 = vmatprep.mubr.f32.mxu0 0.0
        %v411 = vand.u32 %v207, 4294901760
        %v412 = vsub.f32 %v207, %v411
        %v413 = vand.u32 %v412, 4294901760
        %v414 = vsub.f32 %v412, %v413
        %v415 = vand.u32 %v414, 4294901760
        %416 = vmatmul.mubr.f32.gmra.mxu0 %v415
        %v417 = vpop.f32.mrf.mxu0
        %v418 = vadd.f32 0.0, %v417
        %v419 = vpop.f32.mrf.mxu0
        %420 = vmatprep.mubr.f32.mxu0 0.0
        %v421 = vand.u32 %v210, 4294901760
        %v422 = vsub.f32 %v210, %v421
        %v423 = vand.u32 %v422, 4294901760
        %v424 = vsub.f32 %v422, %v423
        %v425 = vand.u32 %v424, 4294901760
        %426 = vmatmul.mubr.f32.gmra.mxu0 %v425
        %v427 = vpop.f32.mrf.mxu0
        %v428 = vadd.f32 0.0, %v427
        %v429 = vpop.f32.mrf.mxu0
        %430 = vmatprep.mubr.f32.mxu0 0.0
        %v431 = vand.u32 %v213, 4294901760
        %v432 = vsub.f32 %v213, %v431
        %v433 = vand.u32 %v432, 4294901760
        %v434 = vsub.f32 %v432, %v433
        %v435 = vand.u32 %v434, 4294901760
        %436 = vmatmul.mubr.f32.gmra.mxu0 %v435
        %v437 = vpop.f32.mrf.mxu0
        %v438 = vadd.f32 0.0, %v437
        %v439 = vpop.f32.mrf.mxu0
        %440 = vmatprep.mubr.f32.mxu0 0.0
        %v441 = vand.u32 %v216, 4294901760
        %v442 = vsub.f32 %v216, %v441
        %v443 = vand.u32 %v442, 4294901760
        %v444 = vsub.f32 %v442, %v443
        %v445 = vand.u32 %v444, 4294901760
        %446 = vmatmul.mubr.f32.gmra.mxu0 %v445
        %v447 = vpop.f32.mrf.mxu0
        %v448 = vadd.f32 0.0, %v447
        %v449 = vpop.f32.mrf.mxu0
        %450 = vmatprep.mubr.f32.mxu0 0.0
        %v451 = vand.u32 %v219, 4294901760
        %v452 = vsub.f32 %v219, %v451
        %v453 = vand.u32 %v452, 4294901760
        %v454 = vsub.f32 %v452, %v453
        %v455 = vand.u32 %v454, 4294901760
        %456 = vmatmul.mubr.f32.gmra.mxu0 %v455
        %v457 = vpop.f32.mrf.mxu0
        %v458 = vadd.f32 0.0, %v457
        %v459 = vpop.f32.mrf.mxu0
        %460 = vmatprep.mubr.f32.mxu0 0.0
        %v461 = vand.u32 %v222, 4294901760
        %v462 = vsub.f32 %v222, %v461
        %v463 = vand.u32 %v462, 4294901760
        %v464 = vsub.f32 %v462, %v463
        %v465 = vand.u32 %v464, 4294901760
        %466 = vmatmul.mubr.f32.gmra.mxu0 %v465
        %v467 = vpop.f32.mrf.mxu0
        %v468 = vadd.f32 0.0, %v467
        %v469 = vpop.f32.mrf.mxu0
        %470 = vmatprep.mubr.f32.mxu0 0.0
        %v471 = vand.u32 %v225, 4294901760
        %v472 = vsub.f32 %v225, %v471
        %v473 = vand.u32 %v472, 4294901760
        %v474 = vsub.f32 %v472, %v473
        %v475 = vand.u32 %v474, 4294901760
        %476 = vmatmul.mubr.f32.gmra.mxu0 %v475
        %v477 = vpop.f32.mrf.mxu0
        %v478 = vadd.f32 0.0, %v477
        %v479 = vpop.f32.mrf.mxu0
        %480 = vmatprep.mubr.f32.mxu0 0.0
        %v481 = vand.u32 %v228, 4294901760
        %v482 = vsub.f32 %v228, %v481
        %v483 = vand.u32 %v482, 4294901760
        %v484 = vsub.f32 %v482, %v483
        %v485 = vand.u32 %v484, 4294901760
        %486 = vmatmul.mubr.f32.gmra.mxu0 %v485
        %v487 = vpop.f32.mrf.mxu0
        %v488 = vadd.f32 0.0, %v487
        %v489 = vpop.f32.mrf.mxu0
        %490 = vmatprep.mubr.f32.mxu0 0.0
        %v491 = vand.u32 %v231, 4294901760
        %v492 = vsub.f32 %v231, %v491
        %v493 = vand.u32 %v492, 4294901760
        %v494 = vsub.f32 %v492, %v493
        %v495 = vand.u32 %v494, 4294901760
        %496 = vmatmul.mubr.f32.gmra.mxu0 %v495
        %v497 = vpop.f32.mrf.mxu0
        %v498 = vadd.f32 0.0, %v497
        %v499 = vpop.f32.mrf.mxu0
        %500 = vmatprep.mubr.f32.mxu0 0.0
        %v501 = vand.u32 %v234, 4294901760
        %v502 = vsub.f32 %v234, %v501
        %v503 = vand.u32 %v502, 4294901760
        %v504 = vsub.f32 %v502, %v503
        %v505 = vand.u32 %v504, 4294901760
        %506 = vmatmul.mubr.f32.gmra.mxu0 %v505
        %v507 = vpop.f32.mrf.mxu0
        %v508 = vadd.f32 0.0, %v507
        %v509 = vpop.f32.mrf.mxu0
        %510 = vmatprep.mubr.f32.mxu0 0.0
        %v511 = vand.u32 %v237, 4294901760
        %v512 = vsub.f32 %v237, %v511
        %v513 = vand.u32 %v512, 4294901760
        %v514 = vsub.f32 %v512, %v513
        %v515 = vand.u32 %v514, 4294901760
        %516 = vmatmul.mubr.f32.gmra.mxu0 %v515
        %v517 = vpop.f32.mrf.mxu0
        %v518 = vadd.f32 0.0, %v517
        %v519 = vpop.f32.mrf.mxu0
        %520 = vmatprep.mubr.f32.mxu0 0.0
        %v521 = vand.u32 %v240, 4294901760
        %v522 = vsub.f32 %v240, %v521
        %v523 = vand.u32 %v522, 4294901760
        %v524 = vsub.f32 %v522, %v523
        %v525 = vand.u32 %v524, 4294901760
        %526 = vmatmul.mubr.f32.gmra.mxu0 %v525
        %v527 = vpop.f32.mrf.mxu0
        %v528 = vadd.f32 0.0, %v527
        %v529 = vpop.f32.mrf.mxu0
        %530 = vdwg.mxu0
        %531 = vmatprep.subr.mxu0 0.0
        %v532 = vand.u32 %v288, 4294901760
        %v533 = vsub.f32 %v288, %v532
        %v534 = vand.u32 %v533, 4294901760
        %v535 = vsub.f32 %v533, %v534
        %v536 = vand.u32 %v535, 4294901760
        %537 = vmatpush1.xpose.msra.mxu0 %v536
        %538 = vmatprep.subr.mxu0 0.0
        %v539 = vand.u32 %v285, 4294901760
        %v540 = vsub.f32 %v285, %v539
        %v541 = vand.u32 %v540, 4294901760
        %v542 = vsub.f32 %v540, %v541
        %v543 = vand.u32 %v542, 4294901760
        %544 = vmatpush1.xpose.msra.mxu0 %v543
        %545 = vmatprep.subr.mxu0 0.0
        %v546 = vand.u32 %v282, 4294901760
        %v547 = vsub.f32 %v282, %v546
        %v548 = vand.u32 %v547, 4294901760
        %v549 = vsub.f32 %v547, %v548
        %v550 = vand.u32 %v549, 4294901760
        %551 = vmatpush1.xpose.msra.mxu0 %v550
        %552 = vmatprep.subr.mxu0 0.0
        %v553 = vand.u32 %v279, 4294901760
        %v554 = vsub.f32 %v279, %v553
        %v555 = vand.u32 %v554, 4294901760
        %v556 = vsub.f32 %v554, %v555
        %v557 = vand.u32 %v556, 4294901760
        %558 = vmatpush1.xpose.msra.mxu0 %v557
        %559 = vmatprep.subr.mxu0 0.0
        %v560 = vand.u32 %v276, 4294901760
        %v561 = vsub.f32 %v276, %v560
        %v562 = vand.u32 %v561, 4294901760
        %v563 = vsub.f32 %v561, %v562
        %v564 = vand.u32 %v563, 4294901760
        %565 = vmatpush1.xpose.msra.mxu0 %v564
        %566 = vmatprep.subr.mxu0 0.0
        %v567 = vand.u32 %v273, 4294901760
        %v568 = vsub.f32 %v273, %v567
        %v569 = vand.u32 %v568, 4294901760
        %v570 = vsub.f32 %v568, %v569
        %v571 = vand.u32 %v570, 4294901760
        %572 = vmatpush1.xpose.msra.mxu0 %v571
        %573 = vmatprep.subr.mxu0 0.0
        %v574 = vand.u32 %v270, 4294901760
        %v575 = vsub.f32 %v270, %v574
        %v576 = vand.u32 %v575, 4294901760
        %v577 = vsub.f32 %v575, %v576
        %v578 = vand.u32 %v577, 4294901760
        %579 = vmatpush1.xpose.msra.mxu0 %v578
        %580 = vmatprep.subr.mxu0 0.0
        %v581 = vand.u32 %v267, 4294901760
        %v582 = vsub.f32 %v267, %v581
        %v583 = vand.u32 %v582, 4294901760
        %v584 = vsub.f32 %v582, %v583
        %v585 = vand.u32 %v584, 4294901760
        %586 = vmatpush1.xpose.msra.mxu0 %v585
        %587 = vmatprep.subr.mxu0 0.0
        %v588 = vand.u32 %v264, 4294901760
        %v589 = vsub.f32 %v264, %v588
        %v590 = vand.u32 %v589, 4294901760
        %v591 = vsub.f32 %v589, %v590
        %v592 = vand.u32 %v591, 4294901760
        %593 = vmatpush1.xpose.msra.mxu0 %v592
        %594 = vmatprep.subr.mxu0 0.0
        %v595 = vand.u32 %v261, 4294901760
        %v596 = vsub.f32 %v261, %v595
        %v597 = vand.u32 %v596, 4294901760
        %v598 = vsub.f32 %v596, %v597
        %v599 = vand.u32 %v598, 4294901760
        %600 = vmatpush1.xpose.msra.mxu0 %v599
        %601 = vmatprep.subr.mxu0 0.0
        %v602 = vand.u32 %v258, 4294901760
        %v603 = vsub.f32 %v258, %v602
        %v604 = vand.u32 %v603, 4294901760
        %v605 = vsub.f32 %v603, %v604
        %v606 = vand.u32 %v605, 4294901760
        %607 = vmatpush1.xpose.msra.mxu0 %v606
        %608 = vmatprep.subr.mxu0 0.0
        %v609 = vand.u32 %v255, 4294901760
        %v610 = vsub.f32 %v255, %v609
        %v611 = vand.u32 %v610, 4294901760
        %v612 = vsub.f32 %v610, %v611
        %v613 = vand.u32 %v612, 4294901760
        %614 = vmatpush1.xpose.msra.mxu0 %v613
        %615 = vmatprep.subr.mxu0 0.0
        %v616 = vand.u32 %v252, 4294901760
        %v617 = vsub.f32 %v252, %v616
        %v618 = vand.u32 %v617, 4294901760
        %v619 = vsub.f32 %v617, %v618
        %v620 = vand.u32 %v619, 4294901760
        %621 = vmatpush1.xpose.msra.mxu0 %v620
        %622 = vmatprep.subr.mxu0 0.0
        %v623 = vand.u32 %v249, 4294901760
        %v624 = vsub.f32 %v249, %v623
        %v625 = vand.u32 %v624, 4294901760
        %v626 = vsub.f32 %v624, %v625
        %v627 = vand.u32 %v626, 4294901760
        %628 = vmatpush1.xpose.msra.mxu0 %v627
        %629 = vmatprep.subr.mxu0 0.0
        %v630 = vand.u32 %v246, 4294901760
        %v631 = vsub.f32 %v246, %v630
        %v632 = vand.u32 %v631, 4294901760
        %v633 = vsub.f32 %v631, %v632
        %v634 = vand.u32 %v633, 4294901760
        %635 = vmatpush1.xpose.msra.mxu0 %v634
        %636 = vmatprep.subr.mxu0 0.0
        %v637 = vand.u32 %v243, 4294901760
        %v638 = vsub.f32 %v243, %v637
        %v639 = vand.u32 %v638, 4294901760
        %v640 = vsub.f32 %v638, %v639
        %v641 = vand.u32 %v640, 4294901760
        %642 = vmatpush1.xpose.msra.mxu0 %v641
        %643 = vmatprep.subr.mxu0 0.0
        %644 = vmatpush2.xpose.msra.mxu0 0.0
        %645 = vmatprep.subr.mxu0 0.0
        %646 = vmatpush2.xpose.msra.mxu0 0.0
        %647 = vmatprep.subr.mxu0 0.0
        %648 = vmatpush2.xpose.msra.mxu0 0.0
        %649 = vmatprep.subr.mxu0 0.0
        %650 = vmatpush2.xpose.msra.mxu0 0.0
        %651 = vmatprep.subr.mxu0 0.0
        %652 = vmatpush2.xpose.msra.mxu0 0.0
        %653 = vmatprep.subr.mxu0 0.0
        %654 = vmatpush2.xpose.msra.mxu0 0.0
        %655 = vmatprep.subr.mxu0 0.0
        %656 = vmatpush2.xpose.msra.mxu0 0.0
        %657 = vmatprep.subr.mxu0 0.0
        %658 = vmatpush2.xpose.msra.mxu0 0.0
        %659 = vmatprep.subr.mxu0 0.0
        %660 = vmatpush2.xpose.msra.mxu0 0.0
        %661 = vmatprep.subr.mxu0 0.0
        %662 = vmatpush2.xpose.msra.mxu0 0.0
        %663 = vmatprep.subr.mxu0 0.0
        %664 = vmatpush2.xpose.msra.mxu0 0.0
        %665 = vmatprep.subr.mxu0 0.0
        %666 = vmatpush2.xpose.msra.mxu0 0.0
        %667 = vmatprep.subr.mxu0 0.0
        %668 = vmatpush2.xpose.msra.mxu0 0.0
        %669 = vmatprep.subr.mxu0 0.0
        %670 = vmatpush2.xpose.msra.mxu0 0.0
        %671 = vmatprep.subr.mxu0 0.0
        %672 = vmatpush2.xpose.msra.mxu0 0.0
        %673 = vmatprep.subr.mxu0 0.0
        %674 = vmatpush2.xpose.msra.mxu0 0.0
        %675 = vmatprep.mubr.f32.mxu0 0.0
        %v676 = vand.u32 %v195, 4294901760
        %677 = vmatmul.mubr.f32.gmra.mxu0 %v676
        %v678 = vpop.f32.mrf.mxu0
        %v679 = vadd.f32 %v378, %v678
        %v680 = vpop.f32.mrf.mxu0
        %681 = vmatprep.mubr.f32.mxu0 0.0
        %v682 = vand.u32 %v198, 4294901760
        %683 = vmatmul.mubr.f32.gmra.mxu0 %v682
        %v684 = vpop.f32.mrf.mxu0
        %v685 = vadd.f32 %v388, %v684
        %v686 = vpop.f32.mrf.mxu0
        %687 = vmatprep.mubr.f32.mxu0 0.0
        %v688 = vand.u32 %v201, 4294901760
        %689 = vmatmul.mubr.f32.gmra.mxu0 %v688
        %v690 = vpop.f32.mrf.mxu0
        %v691 = vadd.f32 %v398, %v690
        %v692 = vpop.f32.mrf.mxu0
        %693 = vmatprep.mubr.f32.mxu0 0.0
        %v694 = vand.u32 %v204, 4294901760
        %695 = vmatmul.mubr.f32.gmra.mxu0 %v694
        %v696 = vpop.f32.mrf.mxu0
        %v697 = vadd.f32 %v408, %v696
        %v698 = vpop.f32.mrf.mxu0
        %699 = vmatprep.mubr.f32.mxu0 0.0
        %v700 = vand.u32 %v207, 4294901760
        %701 = vmatmul.mubr.f32.gmra.mxu0 %v700
        %v702 = vpop.f32.mrf.mxu0
        %v703 = vadd.f32 %v418, %v702
        %v704 = vpop.f32.mrf.mxu0
        %705 = vmatprep.mubr.f32.mxu0 0.0
        %v706 = vand.u32 %v210, 4294901760
        %707 = vmatmul.mubr.f32.gmra.mxu0 %v706
        %v708 = vpop.f32.mrf.mxu0
        %v709 = vadd.f32 %v428, %v708
        %v710 = vpop.f32.mrf.mxu0
        %711 = vmatprep.mubr.f32.mxu0 0.0
        %v712 = vand.u32 %v213, 4294901760
        %713 = vmatmul.mubr.f32.gmra.mxu0 %v712
        %v714 = vpop.f32.mrf.mxu0
        %v715 = vadd.f32 %v438, %v714
        %v716 = vpop.f32.mrf.mxu0
        %717 = vmatprep.mubr.f32.mxu0 0.0
        %v718 = vand.u32 %v216, 4294901760
        %719 = vmatmul.mubr.f32.gmra.mxu0 %v718
        %v720 = vpop.f32.mrf.mxu0
        %v721 = vadd.f32 %v448, %v720
        %v722 = vpop.f32.mrf.mxu0
        %723 = vmatprep.mubr.f32.mxu0 0.0
        %v724 = vand.u32 %v219, 4294901760
        %725 = vmatmul.mubr.f32.gmra.mxu0 %v724
        %v726 = vpop.f32.mrf.mxu0
        %v727 = vadd.f32 %v458, %v726
        %v728 = vpop.f32.mrf.mxu0
        %729 = vmatprep.mubr.f32.mxu0 0.0
        %v730 = vand.u32 %v222, 4294901760
        %731 = vmatmul.mubr.f32.gmra.mxu0 %v730
        %v732 = vpop.f32.mrf.mxu0
        %v733 = vadd.f32 %v468, %v732
        %v734 = vpop.f32.mrf.mxu0
        %735 = vmatprep.mubr.f32.mxu0 0.0
        %v736 = vand.u32 %v225, 4294901760
        %737 = vmatmul.mubr.f32.gmra.mxu0 %v736
        %v738 = vpop.f32.mrf.mxu0
        %v739 = vadd.f32 %v478, %v738
        %v740 = vpop.f32.mrf.mxu0
        %741 = vmatprep.mubr.f32.mxu0 0.0
        %v742 = vand.u32 %v228, 4294901760
        %743 = vmatmul.mubr.f32.gmra.mxu0 %v742
        %v744 = vpop.f32.mrf.mxu0
        %v745 = vadd.f32 %v488, %v744
        %v746 = vpop.f32.mrf.mxu0
        %747 = vmatprep.mubr.f32.mxu0 0.0
        %v748 = vand.u32 %v231, 4294901760
        %749 = vmatmul.mubr.f32.gmra.mxu0 %v748
        %v750 = vpop.f32.mrf.mxu0
        %v751 = vadd.f32 %v498, %v750
        %v752 = vpop.f32.mrf.mxu0
        %753 = vmatprep.mubr.f32.mxu0 0.0
        %v754 = vand.u32 %v234, 4294901760
        %755 = vmatmul.mubr.f32.gmra.mxu0 %v754
        %v756 = vpop.f32.mrf.mxu0
        %v757 = vadd.f32 %v508, %v756
        %v758 = vpop.f32.mrf.mxu0
        %759 = vmatprep.mubr.f32.mxu0 0.0
        %v760 = vand.u32 %v237, 4294901760
        %761 = vmatmul.mubr.f32.gmra.mxu0 %v760
        %v762 = vpop.f32.mrf.mxu0
        %v763 = vadd.f32 %v518, %v762
        %v764 = vpop.f32.mrf.mxu0
        %765 = vmatprep.mubr.f32.mxu0 0.0
        %v766 = vand.u32 %v240, 4294901760
        %767 = vmatmul.mubr.f32.gmra.mxu0 %v766
        %v768 = vpop.f32.mrf.mxu0
        %v769 = vadd.f32 %v528, %v768
        %v770 = vpop.f32.mrf.mxu0
        %771 = vdwg.mxu0
        %772 = vmatprep.subr.mxu0 0.0
        %v773 = vand.u32 %v288, 4294901760
        %v774 = vsub.f32 %v288, %v773
        %775 = vmatpush1.xpose.msra.mxu0 %v774
        %776 = vmatprep.subr.mxu0 0.0
        %v777 = vand.u32 %v285, 4294901760
        %v778 = vsub.f32 %v285, %v777
        %779 = vmatpush1.xpose.msra.mxu0 %v778
        %780 = vmatprep.subr.mxu0 0.0
        %v781 = vand.u32 %v282, 4294901760
        %v782 = vsub.f32 %v282, %v781
        %783 = vmatpush1.xpose.msra.mxu0 %v782
        %784 = vmatprep.subr.mxu0 0.0
        %v785 = vand.u32 %v279, 4294901760
        %v786 = vsub.f32 %v279, %v785
        %787 = vmatpush1.xpose.msra.mxu0 %v786
        %788 = vmatprep.subr.mxu0 0.0
        %v789 = vand.u32 %v276, 4294901760
        %v790 = vsub.f32 %v276, %v789
        %791 = vmatpush1.xpose.msra.mxu0 %v790
        %792 = vmatprep.subr.mxu0 0.0
        %v793 = vand.u32 %v273, 4294901760
        %v794 = vsub.f32 %v273, %v793
        %795 = vmatpush1.xpose.msra.mxu0 %v794
        %796 = vmatprep.subr.mxu0 0.0
        %v797 = vand.u32 %v270, 4294901760
        %v798 = vsub.f32 %v270, %v797
        %799 = vmatpush1.xpose.msra.mxu0 %v798
        %800 = vmatprep.subr.mxu0 0.0
        %v801 = vand.u32 %v267, 4294901760
        %v802 = vsub.f32 %v267, %v801
        %803 = vmatpush1.xpose.msra.mxu0 %v802
        %804 = vmatprep.subr.mxu0 0.0
        %v805 = vand.u32 %v264, 4294901760
        %v806 = vsub.f32 %v264, %v805
        %807 = vmatpush1.xpose.msra.mxu0 %v806
        %808 = vmatprep.subr.mxu0 0.0
        %v809 = vand.u32 %v261, 4294901760
        %v810 = vsub.f32 %v261, %v809
        %811 = vmatpush1.xpose.msra.mxu0 %v810
        %812 = vmatprep.subr.mxu0 0.0
        %v813 = vand.u32 %v258, 4294901760
        %v814 = vsub.f32 %v258, %v813
        %815 = vmatpush1.xpose.msra.mxu0 %v814
        %816 = vmatprep.subr.mxu0 0.0
        %v817 = vand.u32 %v255, 4294901760
        %v818 = vsub.f32 %v255, %v817
        %819 = vmatpush1.xpose.msra.mxu0 %v818
        %820 = vmatprep.subr.mxu0 0.0
        %v821 = vand.u32 %v252, 4294901760
        %v822 = vsub.f32 %v252, %v821
        %823 = vmatpush1.xpose.msra.mxu0 %v822
        %824 = vmatprep.subr.mxu0 0.0
        %v825 = vand.u32 %v249, 4294901760
        %v826 = vsub.f32 %v249, %v825
        %827 = vmatpush1.xpose.msra.mxu0 %v826
        %828 = vmatprep.subr.mxu0 0.0
        %v829 = vand.u32 %v246, 4294901760
        %v830 = vsub.f32 %v246, %v829
        %831 = vmatpush1.xpose.msra.mxu0 %v830
        %832 = vmatprep.subr.mxu0 0.0
        %v833 = vand.u32 %v243, 4294901760
        %v834 = vsub.f32 %v243, %v833
        %835 = vmatpush1.xpose.msra.mxu0 %v834
        %836 = vmatprep.subr.mxu0 0.0
        %837 = vmatpush2.xpose.msra.mxu0 0.0
        %838 = vmatprep.subr.mxu0 0.0
        %839 = vmatpush2.xpose.msra.mxu0 0.0
        %840 = vmatprep.subr.mxu0 0.0
        %841 = vmatpush2.xpose.msra.mxu0 0.0
        %842 = vmatprep.subr.mxu0 0.0
        %843 = vmatpush2.xpose.msra.mxu0 0.0
        %844 = vmatprep.subr.mxu0 0.0
        %845 = vmatpush2.xpose.msra.mxu0 0.0
        %846 = vmatprep.subr.mxu0 0.0
        %847 = vmatpush2.xpose.msra.mxu0 0.0
        %848 = vmatprep.subr.mxu0 0.0
        %849 = vmatpush2.xpose.msra.mxu0 0.0
        %850 = vmatprep.subr.mxu0 0.0
        %851 = vmatpush2.xpose.msra.mxu0 0.0
        %852 = vmatprep.subr.mxu0 0.0
        %853 = vmatpush2.xpose.msra.mxu0 0.0
        %854 = vmatprep.subr.mxu0 0.0
        %855 = vmatpush2.xpose.msra.mxu0 0.0
        %856 = vmatprep.subr.mxu0 0.0
        %857 = vmatpush2.xpose.msra.mxu0 0.0
        %858 = vmatprep.subr.mxu0 0.0
        %859 = vmatpush2.xpose.msra.mxu0 0.0
        %860 = vmatprep.subr.mxu0 0.0
        %861 = vmatpush2.xpose.msra.mxu0 0.0
        %862 = vmatprep.subr.mxu0 0.0
        %863 = vmatpush2.xpose.msra.mxu0 0.0
        %864 = vmatprep.subr.mxu0 0.0
        %865 = vmatpush2.xpose.msra.mxu0 0.0
        %866 = vmatprep.subr.mxu0 0.0
        %867 = vmatpush2.xpose.msra.mxu0 0.0
        %868 = vmatprep.mubr.f32.mxu0 0.0
        %v869 = vand.u32 %v195, 4294901760
        %v870 = vsub.f32 %v195, %v869
        %871 = vmatmul.mubr.f32.gmra.mxu0 %v870
        %v872 = vpop.f32.mrf.mxu0
        %v873 = vadd.f32 %v679, %v872
        %v874 = vpop.f32.mrf.mxu0
        %875 = vmatprep.mubr.f32.mxu0 0.0
        %v876 = vand.u32 %v198, 4294901760
        %v877 = vsub.f32 %v198, %v876
        %878 = vmatmul.mubr.f32.gmra.mxu0 %v877
        %v879 = vpop.f32.mrf.mxu0
        %v880 = vadd.f32 %v685, %v879
        %v881 = vpop.f32.mrf.mxu0
        %882 = vmatprep.mubr.f32.mxu0 0.0
        %v883 = vand.u32 %v201, 4294901760
        %v884 = vsub.f32 %v201, %v883
        %885 = vmatmul.mubr.f32.gmra.mxu0 %v884
        %v886 = vpop.f32.mrf.mxu0
        %v887 = vadd.f32 %v691, %v886
        %v888 = vpop.f32.mrf.mxu0
        %889 = vmatprep.mubr.f32.mxu0 0.0
        %v890 = vand.u32 %v204, 4294901760
        %v891 = vsub.f32 %v204, %v890
        %892 = vmatmul.mubr.f32.gmra.mxu0 %v891
        %v893 = vpop.f32.mrf.mxu0
        %v894 = vadd.f32 %v697, %v893
        %v895 = vpop.f32.mrf.mxu0
        %896 = vmatprep.mubr.f32.mxu0 0.0
        %v897 = vand.u32 %v207, 4294901760
        %v898 = vsub.f32 %v207, %v897
        %899 = vmatmul.mubr.f32.gmra.mxu0 %v898
        %v900 = vpop.f32.mrf.mxu0
        %v901 = vadd.f32 %v703, %v900
        %v902 = vpop.f32.mrf.mxu0
        %903 = vmatprep.mubr.f32.mxu0 0.0
        %v904 = vand.u32 %v210, 4294901760
        %v905 = vsub.f32 %v210, %v904
        %906 = vmatmul.mubr.f32.gmra.mxu0 %v905
        %v907 = vpop.f32.mrf.mxu0
        %v908 = vadd.f32 %v709, %v907
        %v909 = vpop.f32.mrf.mxu0
        %910 = vmatprep.mubr.f32.mxu0 0.0
        %v911 = vand.u32 %v213, 4294901760
        %v912 = vsub.f32 %v213, %v911
        %913 = vmatmul.mubr.f32.gmra.mxu0 %v912
        %v914 = vpop.f32.mrf.mxu0
        %v915 = vadd.f32 %v715, %v914
        %v916 = vpop.f32.mrf.mxu0
        %917 = vmatprep.mubr.f32.mxu0 0.0
        %v918 = vand.u32 %v216, 4294901760
        %v919 = vsub.f32 %v216, %v918
        %920 = vmatmul.mubr.f32.gmra.mxu0 %v919
        %v921 = vpop.f32.mrf.mxu0
        %v922 = vadd.f32 %v721, %v921
        %v923 = vpop.f32.mrf.mxu0
        %924 = vmatprep.mubr.f32.mxu0 0.0
        %v925 = vand.u32 %v219, 4294901760
        %v926 = vsub.f32 %v219, %v925
        %927 = vmatmul.mubr.f32.gmra.mxu0 %v926
        %v928 = vpop.f32.mrf.mxu0
        %v929 = vadd.f32 %v727, %v928
        %v930 = vpop.f32.mrf.mxu0
        %931 = vmatprep.mubr.f32.mxu0 0.0
        %v932 = vand.u32 %v222, 4294901760
        %v933 = vsub.f32 %v222, %v932
        %934 = vmatmul.mubr.f32.gmra.mxu0 %v933
        %v935 = vpop.f32.mrf.mxu0
        %v936 = vadd.f32 %v733, %v935
        %v937 = vpop.f32.mrf.mxu0
        %938 = vmatprep.mubr.f32.mxu0 0.0
        %v939 = vand.u32 %v225, 4294901760
        %v940 = vsub.f32 %v225, %v939
        %941 = vmatmul.mubr.f32.gmra.mxu0 %v940
        %v942 = vpop.f32.mrf.mxu0
        %v943 = vadd.f32 %v739, %v942
        %v944 = vpop.f32.mrf.mxu0
        %945 = vmatprep.mubr.f32.mxu0 0.0
        %v946 = vand.u32 %v228, 4294901760
        %v947 = vsub.f32 %v228, %v946
        %948 = vmatmul.mubr.f32.gmra.mxu0 %v947
        %v949 = vpop.f32.mrf.mxu0
        %v950 = vadd.f32 %v745, %v949
        %v951 = vpop.f32.mrf.mxu0
        %952 = vmatprep.mubr.f32.mxu0 0.0
        %v953 = vand.u32 %v231, 4294901760
        %v954 = vsub.f32 %v231, %v953
        %955 = vmatmul.mubr.f32.gmra.mxu0 %v954
        %v956 = vpop.f32.mrf.mxu0
        %v957 = vadd.f32 %v751, %v956
        %v958 = vpop.f32.mrf.mxu0
        %959 = vmatprep.mubr.f32.mxu0 0.0
        %v960 = vand.u32 %v234, 4294901760
        %v961 = vsub.f32 %v234, %v960
        %962 = vmatmul.mubr.f32.gmra.mxu0 %v961
        %v963 = vpop.f32.mrf.mxu0
        %v964 = vadd.f32 %v757, %v963
        %v965 = vpop.f32.mrf.mxu0
        %966 = vmatprep.mubr.f32.mxu0 0.0
        %v967 = vand.u32 %v237, 4294901760
        %v968 = vsub.f32 %v237, %v967
        %969 = vmatmul.mubr.f32.gmra.mxu0 %v968
        %v970 = vpop.f32.mrf.mxu0
        %v971 = vadd.f32 %v763, %v970
        %v972 = vpop.f32.mrf.mxu0
        %973 = vmatprep.mubr.f32.mxu0 0.0
        %v974 = vand.u32 %v240, 4294901760
        %v975 = vsub.f32 %v240, %v974
        %976 = vmatmul.mubr.f32.gmra.mxu0 %v975
        %v977 = vpop.f32.mrf.mxu0
        %v978 = vadd.f32 %v769, %v977
        %v979 = vpop.f32.mrf.mxu0
        %980 = vdwg.mxu0
        %981 = vmatprep.subr.mxu0 0.0
        %v982 = vand.u32 %v288, 4294901760
        %983 = vmatpush1.xpose.msra.mxu0 %v982
        %984 = vmatprep.subr.mxu0 0.0
        %v985 = vand.u32 %v285, 4294901760
        %986 = vmatpush1.xpose.msra.mxu0 %v985
        %987 = vmatprep.subr.mxu0 0.0
        %v988 = vand.u32 %v282, 4294901760
        %989 = vmatpush1.xpose.msra.mxu0 %v988
        %990 = vmatprep.subr.mxu0 0.0
        %v991 = vand.u32 %v279, 4294901760
        %992 = vmatpush1.xpose.msra.mxu0 %v991
        %993 = vmatprep.subr.mxu0 0.0
        %v994 = vand.u32 %v276, 4294901760
        %995 = vmatpush1.xpose.msra.mxu0 %v994
        %996 = vmatprep.subr.mxu0 0.0
        %v997 = vand.u32 %v273, 4294901760
        %998 = vmatpush1.xpose.msra.mxu0 %v997
        %999 = vmatprep.subr.mxu0 0.0
        %v1000 = vand.u32 %v270, 4294901760
        %1001 = vmatpush1.xpose.msra.mxu0 %v1000
        %1002 = vmatprep.subr.mxu0 0.0
        %v1003 = vand.u32 %v267, 4294901760
        %1004 = vmatpush1.xpose.msra.mxu0 %v1003
        %1005 = vmatprep.subr.mxu0 0.0
        %v1006 = vand.u32 %v264, 4294901760
        %1007 = vmatpush1.xpose.msra.mxu0 %v1006
        %1008 = vmatprep.subr.mxu0 0.0
        %v1009 = vand.u32 %v261, 4294901760
        %1010 = vmatpush1.xpose.msra.mxu0 %v1009
        %1011 = vmatprep.subr.mxu0 0.0
        %v1012 = vand.u32 %v258, 4294901760
        %1013 = vmatpush1.xpose.msra.mxu0 %v1012
        %1014 = vmatprep.subr.mxu0 0.0
        %v1015 = vand.u32 %v255, 4294901760
        %1016 = vmatpush1.xpose.msra.mxu0 %v1015
        %1017 = vmatprep.subr.mxu0 0.0
        %v1018 = vand.u32 %v252, 4294901760
        %1019 = vmatpush1.xpose.msra.mxu0 %v1018
        %1020 = vmatprep.subr.mxu0 0.0
        %v1021 = vand.u32 %v249, 4294901760
        %1022 = vmatpush1.xpose.msra.mxu0 %v1021
        %1023 = vmatprep.subr.mxu0 0.0
        %v1024 = vand.u32 %v246, 4294901760
        %1025 = vmatpush1.xpose.msra.mxu0 %v1024
        %1026 = vmatprep.subr.mxu0 0.0
        %v1027 = vand.u32 %v243, 4294901760
        %1028 = vmatpush1.xpose.msra.mxu0 %v1027
        %1029 = vmatprep.subr.mxu0 0.0
        %1030 = vmatpush2.xpose.msra.mxu0 0.0
        %1031 = vmatprep.subr.mxu0 0.0
        %1032 = vmatpush2.xpose.msra.mxu0 0.0
        %1033 = vmatprep.subr.mxu0 0.0
        %1034 = vmatpush2.xpose.msra.mxu0 0.0
        %1035 = vmatprep.subr.mxu0 0.0
        %1036 = vmatpush2.xpose.msra.mxu0 0.0
        %1037 = vmatprep.subr.mxu0 0.0
        %1038 = vmatpush2.xpose.msra.mxu0 0.0
        %1039 = vmatprep.subr.mxu0 0.0
        %1040 = vmatpush2.xpose.msra.mxu0 0.0
        %1041 = vmatprep.subr.mxu0 0.0
        %1042 = vmatpush2.xpose.msra.mxu0 0.0
        %1043 = vmatprep.subr.mxu0 0.0
        %1044 = vmatpush2.xpose.msra.mxu0 0.0
        %1045 = vmatprep.subr.mxu0 0.0
        %1046 = vmatpush2.xpose.msra.mxu0 0.0
        %1047 = vmatprep.subr.mxu0 0.0
        %1048 = vmatpush2.xpose.msra.mxu0 0.0
        %1049 = vmatprep.subr.mxu0 0.0
        %1050 = vmatpush2.xpose.msra.mxu0 0.0
        %1051 = vmatprep.subr.mxu0 0.0
        %1052 = vmatpush2.xpose.msra.mxu0 0.0
        %1053 = vmatprep.subr.mxu0 0.0
        %1054 = vmatpush2.xpose.msra.mxu0 0.0
        %1055 = vmatprep.subr.mxu0 0.0
        %1056 = vmatpush2.xpose.msra.mxu0 0.0
        %1057 = vmatprep.subr.mxu0 0.0
        %1058 = vmatpush2.xpose.msra.mxu0 0.0
        %1059 = vmatprep.subr.mxu0 0.0
        %1060 = vmatpush2.xpose.msra.mxu0 0.0
        %1061 = vmatprep.mubr.f32.mxu0 0.0
        %v1062 = vand.u32 %v195, 4294901760
        %v1063 = vsub.f32 %v195, %v1062
        %v1064 = vand.u32 %v1063, 4294901760
        %1065 = vmatmul.mubr.f32.gmra.mxu0 %v1064
        %v1066 = vpop.f32.mrf.mxu0
        %v1067 = vadd.f32 %v873, %v1066
        %v1068 = vpop.f32.mrf.mxu0
        %1069 = vmatprep.mubr.f32.mxu0 0.0
        %v1070 = vand.u32 %v198, 4294901760
        %v1071 = vsub.f32 %v198, %v1070
        %v1072 = vand.u32 %v1071, 4294901760
        %1073 = vmatmul.mubr.f32.gmra.mxu0 %v1072
        %v1074 = vpop.f32.mrf.mxu0
        %v1075 = vadd.f32 %v880, %v1074
        %v1076 = vpop.f32.mrf.mxu0
        %1077 = vmatprep.mubr.f32.mxu0 0.0
        %v1078 = vand.u32 %v201, 4294901760
        %v1079 = vsub.f32 %v201, %v1078
        %v1080 = vand.u32 %v1079, 4294901760
        %1081 = vmatmul.mubr.f32.gmra.mxu0 %v1080
        %v1082 = vpop.f32.mrf.mxu0
        %v1083 = vadd.f32 %v887, %v1082
        %v1084 = vpop.f32.mrf.mxu0
        %1085 = vmatprep.mubr.f32.mxu0 0.0
        %v1086 = vand.u32 %v204, 4294901760
        %v1087 = vsub.f32 %v204, %v1086
        %v1088 = vand.u32 %v1087, 4294901760
        %1089 = vmatmul.mubr.f32.gmra.mxu0 %v1088
        %v1090 = vpop.f32.mrf.mxu0
        %v1091 = vadd.f32 %v894, %v1090
        %v1092 = vpop.f32.mrf.mxu0
        %1093 = vmatprep.mubr.f32.mxu0 0.0
        %v1094 = vand.u32 %v207, 4294901760
        %v1095 = vsub.f32 %v207, %v1094
        %v1096 = vand.u32 %v1095, 4294901760
        %1097 = vmatmul.mubr.f32.gmra.mxu0 %v1096
        %v1098 = vpop.f32.mrf.mxu0
        %v1099 = vadd.f32 %v901, %v1098
        %v1100 = vpop.f32.mrf.mxu0
        %1101 = vmatprep.mubr.f32.mxu0 0.0
        %v1102 = vand.u32 %v210, 4294901760
        %v1103 = vsub.f32 %v210, %v1102
        %v1104 = vand.u32 %v1103, 4294901760
        %1105 = vmatmul.mubr.f32.gmra.mxu0 %v1104
        %v1106 = vpop.f32.mrf.mxu0
        %v1107 = vadd.f32 %v908, %v1106
        %v1108 = vpop.f32.mrf.mxu0
        %1109 = vmatprep.mubr.f32.mxu0 0.0
        %v1110 = vand.u32 %v213, 4294901760
        %v1111 = vsub.f32 %v213, %v1110
        %v1112 = vand.u32 %v1111, 4294901760
        %1113 = vmatmul.mubr.f32.gmra.mxu0 %v1112
        %v1114 = vpop.f32.mrf.mxu0
        %v1115 = vadd.f32 %v915, %v1114
        %v1116 = vpop.f32.mrf.mxu0
        %1117 = vmatprep.mubr.f32.mxu0 0.0
        %v1118 = vand.u32 %v216, 4294901760
        %v1119 = vsub.f32 %v216, %v1118
        %v1120 = vand.u32 %v1119, 4294901760
        %1121 = vmatmul.mubr.f32.gmra.mxu0 %v1120
        %v1122 = vpop.f32.mrf.mxu0
        %v1123 = vadd.f32 %v922, %v1122
        %v1124 = vpop.f32.mrf.mxu0
        %1125 = vmatprep.mubr.f32.mxu0 0.0
        %v1126 = vand.u32 %v219, 4294901760
        %v1127 = vsub.f32 %v219, %v1126
        %v1128 = vand.u32 %v1127, 4294901760
        %1129 = vmatmul.mubr.f32.gmra.mxu0 %v1128
        %v1130 = vpop.f32.mrf.mxu0
        %v1131 = vadd.f32 %v929, %v1130
        %v1132 = vpop.f32.mrf.mxu0
        %1133 = vmatprep.mubr.f32.mxu0 0.0
        %v1134 = vand.u32 %v222, 4294901760
        %v1135 = vsub.f32 %v222, %v1134
        %v1136 = vand.u32 %v1135, 4294901760
        %1137 = vmatmul.mubr.f32.gmra.mxu0 %v1136
        %v1138 = vpop.f32.mrf.mxu0
        %v1139 = vadd.f32 %v936, %v1138
        %v1140 = vpop.f32.mrf.mxu0
        %1141 = vmatprep.mubr.f32.mxu0 0.0
        %v1142 = vand.u32 %v225, 4294901760
        %v1143 = vsub.f32 %v225, %v1142
        %v1144 = vand.u32 %v1143, 4294901760
        %1145 = vmatmul.mubr.f32.gmra.mxu0 %v1144
        %v1146 = vpop.f32.mrf.mxu0
        %v1147 = vadd.f32 %v943, %v1146
        %v1148 = vpop.f32.mrf.mxu0
        %1149 = vmatprep.mubr.f32.mxu0 0.0
        %v1150 = vand.u32 %v228, 4294901760
        %v1151 = vsub.f32 %v228, %v1150
        %v1152 = vand.u32 %v1151, 4294901760
        %1153 = vmatmul.mubr.f32.gmra.mxu0 %v1152
        %v1154 = vpop.f32.mrf.mxu0
        %v1155 = vadd.f32 %v950, %v1154
        %v1156 = vpop.f32.mrf.mxu0
        %1157 = vmatprep.mubr.f32.mxu0 0.0
        %v1158 = vand.u32 %v231, 4294901760
        %v1159 = vsub.f32 %v231, %v1158
        %v1160 = vand.u32 %v1159, 4294901760
        %1161 = vmatmul.mubr.f32.gmra.mxu0 %v1160
        %v1162 = vpop.f32.mrf.mxu0
        %v1163 = vadd.f32 %v957, %v1162
        %v1164 = vpop.f32.mrf.mxu0
        %1165 = vmatprep.mubr.f32.mxu0 0.0
        %v1166 = vand.u32 %v234, 4294901760
        %v1167 = vsub.f32 %v234, %v1166
        %v1168 = vand.u32 %v1167, 4294901760
        %1169 = vmatmul.mubr.f32.gmra.mxu0 %v1168
        %v1170 = vpop.f32.mrf.mxu0
        %v1171 = vadd.f32 %v964, %v1170
        %v1172 = vpop.f32.mrf.mxu0
        %1173 = vmatprep.mubr.f32.mxu0 0.0
        %v1174 = vand.u32 %v237, 4294901760
        %v1175 = vsub.f32 %v237, %v1174
        %v1176 = vand.u32 %v1175, 4294901760
        %1177 = vmatmul.mubr.f32.gmra.mxu0 %v1176
        %v1178 = vpop.f32.mrf.mxu0
        %v1179 = vadd.f32 %v971, %v1178
        %v1180 = vpop.f32.mrf.mxu0
        %1181 = vmatprep.mubr.f32.mxu0 0.0
        %v1182 = vand.u32 %v240, 4294901760
        %v1183 = vsub.f32 %v240, %v1182
        %v1184 = vand.u32 %v1183, 4294901760
        %1185 = vmatmul.mubr.f32.gmra.mxu0 %v1184
        %v1186 = vpop.f32.mrf.mxu0
        %v1187 = vadd.f32 %v978, %v1186
        %v1188 = vpop.f32.mrf.mxu0
        %1189 = vdwg.mxu0
        %1190 = vmatprep.subr.mxu0 0.0
        %v1191 = vand.u32 %v288, 4294901760
        %v1192 = vsub.f32 %v288, %v1191
        %v1193 = vand.u32 %v1192, 4294901760
        %1194 = vmatpush1.xpose.msra.mxu0 %v1193
        %1195 = vmatprep.subr.mxu0 0.0
        %v1196 = vand.u32 %v285, 4294901760
        %v1197 = vsub.f32 %v285, %v1196
        %v1198 = vand.u32 %v1197, 4294901760
        %1199 = vmatpush1.xpose.msra.mxu0 %v1198
        %1200 = vmatprep.subr.mxu0 0.0
        %v1201 = vand.u32 %v282, 4294901760
        %v1202 = vsub.f32 %v282, %v1201
        %v1203 = vand.u32 %v1202, 4294901760
        %1204 = vmatpush1.xpose.msra.mxu0 %v1203
        %1205 = vmatprep.subr.mxu0 0.0
        %v1206 = vand.u32 %v279, 4294901760
        %v1207 = vsub.f32 %v279, %v1206
        %v1208 = vand.u32 %v1207, 4294901760
        %1209 = vmatpush1.xpose.msra.mxu0 %v1208
        %1210 = vmatprep.subr.mxu0 0.0
        %v1211 = vand.u32 %v276, 4294901760
        %v1212 = vsub.f32 %v276, %v1211
        %v1213 = vand.u32 %v1212, 4294901760
        %1214 = vmatpush1.xpose.msra.mxu0 %v1213
        %1215 = vmatprep.subr.mxu0 0.0
        %v1216 = vand.u32 %v273, 4294901760
        %v1217 = vsub.f32 %v273, %v1216
        %v1218 = vand.u32 %v1217, 4294901760
        %1219 = vmatpush1.xpose.msra.mxu0 %v1218
        %1220 = vmatprep.subr.mxu0 0.0
        %v1221 = vand.u32 %v270, 4294901760
        %v1222 = vsub.f32 %v270, %v1221
        %v1223 = vand.u32 %v1222, 4294901760
        %1224 = vmatpush1.xpose.msra.mxu0 %v1223
        %1225 = vmatprep.subr.mxu0 0.0
        %v1226 = vand.u32 %v267, 4294901760
        %v1227 = vsub.f32 %v267, %v1226
        %v1228 = vand.u32 %v1227, 4294901760
        %1229 = vmatpush1.xpose.msra.mxu0 %v1228
        %1230 = vmatprep.subr.mxu0 0.0
        %v1231 = vand.u32 %v264, 4294901760
        %v1232 = vsub.f32 %v264, %v1231
        %v1233 = vand.u32 %v1232, 4294901760
        %1234 = vmatpush1.xpose.msra.mxu0 %v1233
        %1235 = vmatprep.subr.mxu0 0.0
        %v1236 = vand.u32 %v261, 4294901760
        %v1237 = vsub.f32 %v261, %v1236
        %v1238 = vand.u32 %v1237, 4294901760
        %1239 = vmatpush1.xpose.msra.mxu0 %v1238
        %1240 = vmatprep.subr.mxu0 0.0
        %v1241 = vand.u32 %v258, 4294901760
        %v1242 = vsub.f32 %v258, %v1241
        %v1243 = vand.u32 %v1242, 4294901760
        %1244 = vmatpush1.xpose.msra.mxu0 %v1243
        %1245 = vmatprep.subr.mxu0 0.0
        %v1246 = vand.u32 %v255, 4294901760
        %v1247 = vsub.f32 %v255, %v1246
        %v1248 = vand.u32 %v1247, 4294901760
        %1249 = vmatpush1.xpose.msra.mxu0 %v1248
        %1250 = vmatprep.subr.mxu0 0.0
        %v1251 = vand.u32 %v252, 4294901760
        %v1252 = vsub.f32 %v252, %v1251
        %v1253 = vand.u32 %v1252, 4294901760
        %1254 = vmatpush1.xpose.msra.mxu0 %v1253
        %1255 = vmatprep.subr.mxu0 0.0
        %v1256 = vand.u32 %v249, 4294901760
        %v1257 = vsub.f32 %v249, %v1256
        %v1258 = vand.u32 %v1257, 4294901760
        %1259 = vmatpush1.xpose.msra.mxu0 %v1258
        %1260 = vmatprep.subr.mxu0 0.0
        %v1261 = vand.u32 %v246, 4294901760
        %v1262 = vsub.f32 %v246, %v1261
        %v1263 = vand.u32 %v1262, 4294901760
        %1264 = vmatpush1.xpose.msra.mxu0 %v1263
        %1265 = vmatprep.subr.mxu0 0.0
        %v1266 = vand.u32 %v243, 4294901760
        %v1267 = vsub.f32 %v243, %v1266
        %v1268 = vand.u32 %v1267, 4294901760
        %1269 = vmatpush1.xpose.msra.mxu0 %v1268
        %1270 = vmatprep.subr.mxu0 0.0
        %1271 = vmatpush2.xpose.msra.mxu0 0.0
        %1272 = vmatprep.subr.mxu0 0.0
        %1273 = vmatpush2.xpose.msra.mxu0 0.0
        %1274 = vmatprep.subr.mxu0 0.0
        %1275 = vmatpush2.xpose.msra.mxu0 0.0
        %1276 = vmatprep.subr.mxu0 0.0
        %1277 = vmatpush2.xpose.msra.mxu0 0.0
        %1278 = vmatprep.subr.mxu0 0.0
        %1279 = vmatpush2.xpose.msra.mxu0 0.0
        %1280 = vmatprep.subr.mxu0 0.0
        %1281 = vmatpush2.xpose.msra.mxu0 0.0
        %1282 = vmatprep.subr.mxu0 0.0
        %1283 = vmatpush2.xpose.msra.mxu0 0.0
        %1284 = vmatprep.subr.mxu0 0.0
        %1285 = vmatpush2.xpose.msra.mxu0 0.0
        %1286 = vmatprep.subr.mxu0 0.0
        %1287 = vmatpush2.xpose.msra.mxu0 0.0
        %1288 = vmatprep.subr.mxu0 0.0
        %1289 = vmatpush2.xpose.msra.mxu0 0.0
        %1290 = vmatprep.subr.mxu0 0.0
        %1291 = vmatpush2.xpose.msra.mxu0 0.0
        %1292 = vmatprep.subr.mxu0 0.0
        %1293 = vmatpush2.xpose.msra.mxu0 0.0
        %1294 = vmatprep.subr.mxu0 0.0
        %1295 = vmatpush2.xpose.msra.mxu0 0.0
        %1296 = vmatprep.subr.mxu0 0.0
        %1297 = vmatpush2.xpose.msra.mxu0 0.0
        %1298 = vmatprep.subr.mxu0 0.0
        %1299 = vmatpush2.xpose.msra.mxu0 0.0
        %1300 = vmatprep.subr.mxu0 0.0
        %1301 = vmatpush2.xpose.msra.mxu0 0.0
        %1302 = vmatprep.mubr.f32.mxu0 0.0
        %v1303 = vand.u32 %v195, 4294901760
        %1304 = vmatmul.mubr.f32.gmra.mxu0 %v1303
        %v1305 = vpop.f32.mrf.mxu0
        %v1306 = vadd.f32 %v1067, %v1305
        %v1307 = vpop.f32.mrf.mxu0
        %1308 = vmatprep.mubr.f32.mxu0 0.0
        %v1309 = vand.u32 %v198, 4294901760
        %1310 = vmatmul.mubr.f32.gmra.mxu0 %v1309
        %v1311 = vpop.f32.mrf.mxu0
        %v1312 = vadd.f32 %v1075, %v1311
        %v1313 = vpop.f32.mrf.mxu0
        %1314 = vmatprep.mubr.f32.mxu0 0.0
        %v1315 = vand.u32 %v201, 4294901760
        %1316 = vmatmul.mubr.f32.gmra.mxu0 %v1315
        %v1317 = vpop.f32.mrf.mxu0
        %v1318 = vadd.f32 %v1083, %v1317
        %v1319 = vpop.f32.mrf.mxu0
        %1320 = vmatprep.mubr.f32.mxu0 0.0
        %v1321 = vand.u32 %v204, 4294901760
        %1322 = vmatmul.mubr.f32.gmra.mxu0 %v1321
        %v1323 = vpop.f32.mrf.mxu0
        %v1324 = vadd.f32 %v1091, %v1323
        %v1325 = vpop.f32.mrf.mxu0
        %1326 = vmatprep.mubr.f32.mxu0 0.0
        %v1327 = vand.u32 %v207, 4294901760
        %1328 = vmatmul.mubr.f32.gmra.mxu0 %v1327
        %v1329 = vpop.f32.mrf.mxu0
        %v1330 = vadd.f32 %v1099, %v1329
        %v1331 = vpop.f32.mrf.mxu0
        %1332 = vmatprep.mubr.f32.mxu0 0.0
        %v1333 = vand.u32 %v210, 4294901760
        %1334 = vmatmul.mubr.f32.gmra.mxu0 %v1333
        %v1335 = vpop.f32.mrf.mxu0
        %v1336 = vadd.f32 %v1107, %v1335
        %v1337 = vpop.f32.mrf.mxu0
        %1338 = vmatprep.mubr.f32.mxu0 0.0
        %v1339 = vand.u32 %v213, 4294901760
        %1340 = vmatmul.mubr.f32.gmra.mxu0 %v1339
        %v1341 = vpop.f32.mrf.mxu0
        %v1342 = vadd.f32 %v1115, %v1341
        %v1343 = vpop.f32.mrf.mxu0
        %1344 = vmatprep.mubr.f32.mxu0 0.0
        %v1345 = vand.u32 %v216, 4294901760
        %1346 = vmatmul.mubr.f32.gmra.mxu0 %v1345
        %v1347 = vpop.f32.mrf.mxu0
        %v1348 = vadd.f32 %v1123, %v1347
        %v1349 = vpop.f32.mrf.mxu0
        %1350 = vmatprep.mubr.f32.mxu0 0.0
        %v1351 = vand.u32 %v219, 4294901760
        %1352 = vmatmul.mubr.f32.gmra.mxu0 %v1351
        %v1353 = vpop.f32.mrf.mxu0
        %v1354 = vadd.f32 %v1131, %v1353
        %v1355 = vpop.f32.mrf.mxu0
        %1356 = vmatprep.mubr.f32.mxu0 0.0
        %v1357 = vand.u32 %v222, 4294901760
        %1358 = vmatmul.mubr.f32.gmra.mxu0 %v1357
        %v1359 = vpop.f32.mrf.mxu0
        %v1360 = vadd.f32 %v1139, %v1359
        %v1361 = vpop.f32.mrf.mxu0
        %1362 = vmatprep.mubr.f32.mxu0 0.0
        %v1363 = vand.u32 %v225, 4294901760
        %1364 = vmatmul.mubr.f32.gmra.mxu0 %v1363
        %v1365 = vpop.f32.mrf.mxu0
        %v1366 = vadd.f32 %v1147, %v1365
        %v1367 = vpop.f32.mrf.mxu0
        %1368 = vmatprep.mubr.f32.mxu0 0.0
        %v1369 = vand.u32 %v228, 4294901760
        %1370 = vmatmul.mubr.f32.gmra.mxu0 %v1369
        %v1371 = vpop.f32.mrf.mxu0
        %v1372 = vadd.f32 %v1155, %v1371
        %v1373 = vpop.f32.mrf.mxu0
        %1374 = vmatprep.mubr.f32.mxu0 0.0
        %v1375 = vand.u32 %v231, 4294901760
        %1376 = vmatmul.mubr.f32.gmra.mxu0 %v1375
        %v1377 = vpop.f32.mrf.mxu0
        %v1378 = vadd.f32 %v1163, %v1377
        %v1379 = vpop.f32.mrf.mxu0
        %1380 = vmatprep.mubr.f32.mxu0 0.0
        %v1381 = vand.u32 %v234, 4294901760
        %1382 = vmatmul.mubr.f32.gmra.mxu0 %v1381
        %v1383 = vpop.f32.mrf.mxu0
        %v1384 = vadd.f32 %v1171, %v1383
        %v1385 = vpop.f32.mrf.mxu0
        %1386 = vmatprep.mubr.f32.mxu0 0.0
        %v1387 = vand.u32 %v237, 4294901760
        %1388 = vmatmul.mubr.f32.gmra.mxu0 %v1387
        %v1389 = vpop.f32.mrf.mxu0
        %v1390 = vadd.f32 %v1179, %v1389
        %v1391 = vpop.f32.mrf.mxu0
        %1392 = vmatprep.mubr.f32.mxu0 0.0
        %v1393 = vand.u32 %v240, 4294901760
        %1394 = vmatmul.mubr.f32.gmra.mxu0 %v1393
        %v1395 = vpop.f32.mrf.mxu0
        %v1396 = vadd.f32 %v1187, %v1395
        %v1397 = vpop.f32.mrf.mxu0
        %1398 = vdwg.mxu0
        %1399 = vmatprep.subr.mxu0 0.0
        %v1400 = vand.u32 %v288, 4294901760
        %1401 = vmatpush1.xpose.msra.mxu0 %v1400
        %1402 = vmatprep.subr.mxu0 0.0
        %v1403 = vand.u32 %v285, 4294901760
        %1404 = vmatpush1.xpose.msra.mxu0 %v1403
        %1405 = vmatprep.subr.mxu0 0.0
        %v1406 = vand.u32 %v282, 4294901760
        %1407 = vmatpush1.xpose.msra.mxu0 %v1406
        %1408 = vmatprep.subr.mxu0 0.0
        %v1409 = vand.u32 %v279, 4294901760
        %1410 = vmatpush1.xpose.msra.mxu0 %v1409
        %1411 = vmatprep.subr.mxu0 0.0
        %v1412 = vand.u32 %v276, 4294901760
        %1413 = vmatpush1.xpose.msra.mxu0 %v1412
        %1414 = vmatprep.subr.mxu0 0.0
        %v1415 = vand.u32 %v273, 4294901760
        %1416 = vmatpush1.xpose.msra.mxu0 %v1415
        %1417 = vmatprep.subr.mxu0 0.0
        %v1418 = vand.u32 %v270, 4294901760
        %1419 = vmatpush1.xpose.msra.mxu0 %v1418
        %1420 = vmatprep.subr.mxu0 0.0
        %v1421 = vand.u32 %v267, 4294901760
        %1422 = vmatpush1.xpose.msra.mxu0 %v1421
        %1423 = vmatprep.subr.mxu0 0.0
        %v1424 = vand.u32 %v264, 4294901760
        %1425 = vmatpush1.xpose.msra.mxu0 %v1424
        %1426 = vmatprep.subr.mxu0 0.0
        %v1427 = vand.u32 %v261, 4294901760
        %1428 = vmatpush1.xpose.msra.mxu0 %v1427
        %1429 = vmatprep.subr.mxu0 0.0
        %v1430 = vand.u32 %v258, 4294901760
        %1431 = vmatpush1.xpose.msra.mxu0 %v1430
        %1432 = vmatprep.subr.mxu0 0.0
        %v1433 = vand.u32 %v255, 4294901760
        %1434 = vmatpush1.xpose.msra.mxu0 %v1433
        %1435 = vmatprep.subr.mxu0 0.0
        %v1436 = vand.u32 %v252, 4294901760
        %1437 = vmatpush1.xpose.msra.mxu0 %v1436
        %1438 = vmatprep.subr.mxu0 0.0
        %v1439 = vand.u32 %v249, 4294901760
        %1440 = vmatpush1.xpose.msra.mxu0 %v1439
        %1441 = vmatprep.subr.mxu0 0.0
        %v1442 = vand.u32 %v246, 4294901760
        %1443 = vmatpush1.xpose.msra.mxu0 %v1442
        %1444 = vmatprep.subr.mxu0 0.0
        %v1445 = vand.u32 %v243, 4294901760
        %1446 = vmatpush1.xpose.msra.mxu0 %v1445
        %1447 = vmatprep.subr.mxu0 0.0
        %1448 = vmatpush2.xpose.msra.mxu0 0.0
        %1449 = vmatprep.subr.mxu0 0.0
        %1450 = vmatpush2.xpose.msra.mxu0 0.0
        %1451 = vmatprep.subr.mxu0 0.0
        %1452 = vmatpush2.xpose.msra.mxu0 0.0
        %1453 = vmatprep.subr.mxu0 0.0
        %1454 = vmatpush2.xpose.msra.mxu0 0.0
        %1455 = vmatprep.subr.mxu0 0.0
        %1456 = vmatpush2.xpose.msra.mxu0 0.0
        %1457 = vmatprep.subr.mxu0 0.0
        %1458 = vmatpush2.xpose.msra.mxu0 0.0
        %1459 = vmatprep.subr.mxu0 0.0
        %1460 = vmatpush2.xpose.msra.mxu0 0.0
        %1461 = vmatprep.subr.mxu0 0.0
        %1462 = vmatpush2.xpose.msra.mxu0 0.0
        %1463 = vmatprep.subr.mxu0 0.0
        %1464 = vmatpush2.xpose.msra.mxu0 0.0
        %1465 = vmatprep.subr.mxu0 0.0
        %1466 = vmatpush2.xpose.msra.mxu0 0.0
        %1467 = vmatprep.subr.mxu0 0.0
        %1468 = vmatpush2.xpose.msra.mxu0 0.0
        %1469 = vmatprep.subr.mxu0 0.0
        %1470 = vmatpush2.xpose.msra.mxu0 0.0
        %1471 = vmatprep.subr.mxu0 0.0
        %1472 = vmatpush2.xpose.msra.mxu0 0.0
        %1473 = vmatprep.subr.mxu0 0.0
        %1474 = vmatpush2.xpose.msra.mxu0 0.0
        %1475 = vmatprep.subr.mxu0 0.0
        %1476 = vmatpush2.xpose.msra.mxu0 0.0
        %1477 = vmatprep.subr.mxu0 0.0
        %1478 = vmatpush2.xpose.msra.mxu0 0.0
        %1479 = vmatprep.mubr.f32.mxu0 0.0
        %v1480 = vand.u32 %v195, 4294901760
        %1481 = vmatmul.mubr.f32.gmra.mxu0 %v1480
        %v1482 = vpop.f32.mrf.mxu0
        %v1483 = vadd.f32 %v1306, %v1482
        %v1484 = vpop.f32.mrf.mxu0
        %1485 = vmatprep.mubr.f32.mxu0 0.0
        %v1486 = vand.u32 %v198, 4294901760
        %1487 = vmatmul.mubr.f32.gmra.mxu0 %v1486
        %v1488 = vpop.f32.mrf.mxu0
        %v1489 = vadd.f32 %v1312, %v1488
        %v1490 = vpop.f32.mrf.mxu0
        %1491 = vmatprep.mubr.f32.mxu0 0.0
        %v1492 = vand.u32 %v201, 4294901760
        %1493 = vmatmul.mubr.f32.gmra.mxu0 %v1492
        %v1494 = vpop.f32.mrf.mxu0
        %v1495 = vadd.f32 %v1318, %v1494
        %v1496 = vpop.f32.mrf.mxu0
        %1497 = vmatprep.mubr.f32.mxu0 0.0
        %v1498 = vand.u32 %v204, 4294901760
        %1499 = vmatmul.mubr.f32.gmra.mxu0 %v1498
        %v1500 = vpop.f32.mrf.mxu0
        %v1501 = vadd.f32 %v1324, %v1500
        %v1502 = vpop.f32.mrf.mxu0
        %1503 = vmatprep.mubr.f32.mxu0 0.0
        %v1504 = vand.u32 %v207, 4294901760
        %1505 = vmatmul.mubr.f32.gmra.mxu0 %v1504
        %v1506 = vpop.f32.mrf.mxu0
        %v1507 = vadd.f32 %v1330, %v1506
        %v1508 = vpop.f32.mrf.mxu0
        %1509 = vmatprep.mubr.f32.mxu0 0.0
        %v1510 = vand.u32 %v210, 4294901760
        %1511 = vmatmul.mubr.f32.gmra.mxu0 %v1510
        %v1512 = vpop.f32.mrf.mxu0
        %v1513 = vadd.f32 %v1336, %v1512
        %v1514 = vpop.f32.mrf.mxu0
        %1515 = vmatprep.mubr.f32.mxu0 0.0
        %v1516 = vand.u32 %v213, 4294901760
        %1517 = vmatmul.mubr.f32.gmra.mxu0 %v1516
        %v1518 = vpop.f32.mrf.mxu0
        %v1519 = vadd.f32 %v1342, %v1518
        %v1520 = vpop.f32.mrf.mxu0
        %1521 = vmatprep.mubr.f32.mxu0 0.0
        %v1522 = vand.u32 %v216, 4294901760
        %1523 = vmatmul.mubr.f32.gmra.mxu0 %v1522
        %v1524 = vpop.f32.mrf.mxu0
        %v1525 = vadd.f32 %v1348, %v1524
        %v1526 = vpop.f32.mrf.mxu0
        %1527 = vmatprep.mubr.f32.mxu0 0.0
        %v1528 = vand.u32 %v219, 4294901760
        %1529 = vmatmul.mubr.f32.gmra.mxu0 %v1528
        %v1530 = vpop.f32.mrf.mxu0
        %v1531 = vadd.f32 %v1354, %v1530
        %v1532 = vpop.f32.mrf.mxu0
        %1533 = vmatprep.mubr.f32.mxu0 0.0
        %v1534 = vand.u32 %v222, 4294901760
        %1535 = vmatmul.mubr.f32.gmra.mxu0 %v1534
        %v1536 = vpop.f32.mrf.mxu0
        %v1537 = vadd.f32 %v1360, %v1536
        %v1538 = vpop.f32.mrf.mxu0
        %1539 = vmatprep.mubr.f32.mxu0 0.0
        %v1540 = vand.u32 %v225, 4294901760
        %1541 = vmatmul.mubr.f32.gmra.mxu0 %v1540
        %v1542 = vpop.f32.mrf.mxu0
        %v1543 = vadd.f32 %v1366, %v1542
        %v1544 = vpop.f32.mrf.mxu0
        %1545 = vmatprep.mubr.f32.mxu0 0.0
        %v1546 = vand.u32 %v228, 4294901760
        %1547 = vmatmul.mubr.f32.gmra.mxu0 %v1546
        %v1548 = vpop.f32.mrf.mxu0
        %v1549 = vadd.f32 %v1372, %v1548
        %v1550 = vpop.f32.mrf.mxu0
        %1551 = vmatprep.mubr.f32.mxu0 0.0
        %v1552 = vand.u32 %v231, 4294901760
        %1553 = vmatmul.mubr.f32.gmra.mxu0 %v1552
        %v1554 = vpop.f32.mrf.mxu0
        %v1555 = vadd.f32 %v1378, %v1554
        %v1556 = vpop.f32.mrf.mxu0
        %1557 = vmatprep.mubr.f32.mxu0 0.0
        %v1558 = vand.u32 %v234, 4294901760
        %1559 = vmatmul.mubr.f32.gmra.mxu0 %v1558
        %v1560 = vpop.f32.mrf.mxu0
        %v1561 = vadd.f32 %v1384, %v1560
        %v1562 = vpop.f32.mrf.mxu0
        %1563 = vmatprep.mubr.f32.mxu0 0.0
        %v1564 = vand.u32 %v237, 4294901760
        %1565 = vmatmul.mubr.f32.gmra.mxu0 %v1564
        %v1566 = vpop.f32.mrf.mxu0
        %v1567 = vadd.f32 %v1390, %v1566
        %v1568 = vpop.f32.mrf.mxu0
        %1569 = vmatprep.mubr.f32.mxu0 0.0
        %v1570 = vand.u32 %v240, 4294901760
        %1571 = vmatmul.mubr.f32.gmra.mxu0 %v1570
        %v1572 = vpop.f32.mrf.mxu0
        %v1573 = vadd.f32 %v1396, %v1572
        %v1574 = vpop.f32.mrf.mxu0
        %1575 = vdwg.mxu0
        %1577 = vrot.lane.b32.xlu0 %v1483, 256
        %v1578 = vpop.permute.xlu0 %1577
        %s1580 = sor.u32 256, 8
        %1581 = vrot.lane.b32.xlu0 %v1489, %s1580
        %v1582 = vpop.permute.xlu0 %1581
        %s1584 = sor.u32 256, 16
        %1585 = vrot.lane.b32.xlu0 %v1495, %s1584
        %v1586 = vpop.permute.xlu0 %1585
        %s1588 = sor.u32 256, 24
        %1589 = vrot.lane.b32.xlu0 %v1501, %s1588
        %v1590 = vpop.permute.xlu0 %1589
        %s1592 = sor.u32 256, 32
        %1593 = vrot.lane.b32.xlu0 %v1507, %s1592
        %v1594 = vpop.permute.xlu0 %1593
        %s1596 = sor.u32 256, 40
        %1597 = vrot.lane.b32.xlu0 %v1513, %s1596
        %v1598 = vpop.permute.xlu0 %1597
        %s1600 = sor.u32 256, 48
        %1601 = vrot.lane.b32.xlu0 %v1519, %s1600
        %v1602 = vpop.permute.xlu0 %1601
        %s1604 = sor.u32 256, 56
        %1605 = vrot.lane.b32.xlu0 %v1525, %s1604
        %v1606 = vpop.permute.xlu0 %1605
        %s1608 = sor.u32 256, 64
        %1609 = vrot.lane.b32.xlu0 %v1531, %s1608
        %v1610 = vpop.permute.xlu0 %1609
        %s1612 = sor.u32 256, 72
        %1613 = vrot.lane.b32.xlu0 %v1537, %s1612
        %v1614 = vpop.permute.xlu0 %1613
        %s1616 = sor.u32 256, 80
        %1617 = vrot.lane.b32.xlu0 %v1543, %s1616
        %v1618 = vpop.permute.xlu0 %1617
        %s1620 = sor.u32 256, 88
        %1621 = vrot.lane.b32.xlu0 %v1549, %s1620
        %v1622 = vpop.permute.xlu0 %1621
        %s1624 = sor.u32 256, 96
        %1625 = vrot.lane.b32.xlu0 %v1555, %s1624
        %v1626 = vpop.permute.xlu0 %1625
        %s1628 = sor.u32 256, 104
        %1629 = vrot.lane.b32.xlu0 %v1561, %s1628
        %v1630 = vpop.permute.xlu0 %1629
        %s1632 = sor.u32 256, 112
        %1633 = vrot.lane.b32.xlu0 %v1567, %s1632
        %v1634 = vpop.permute.xlu0 %1633
        %s1636 = sor.u32 256, 120
        %1637 = vrot.lane.b32.xlu0 %v1573, %s1636
        %v1638 = vpop.permute.xlu0 %1637
        %v1639 = vadd.f32 %v1578, %v1582
        %v1640 = vadd.f32 %v1639, %v1586
        %v1641 = vadd.f32 %v1640, %v1590
        %v1642 = vadd.f32 %v1641, %v1594
        %v1643 = vadd.f32 %v1642, %v1598
        %v1644 = vadd.f32 %v1643, %v1602
        %v1645 = vadd.f32 %v1644, %v1606
        %v1646 = vadd.f32 %v1645, %v1610
        %v1647 = vadd.f32 %v1646, %v1614
        %v1648 = vadd.f32 %v1647, %v1618
        %v1649 = vadd.f32 %v1648, %v1622
        %v1650 = vadd.f32 %v1649, %v1626
        %v1651 = vadd.f32 %v1650, %v1630
        %v1652 = vadd.f32 %v1651, %v1634
        %v1653 = vadd.f32 %v1652, %v1638
        %v1654 = vrot.slane %v1653, 4
        %v1655 = vadd.f32 %v1653, %v1654
        %v1656 = vrot.slane %v1655, 2
        %v1657 = vadd.f32 %v1655, %v1656
        %v1658 = vrot.slane %v1657, 1
        %v1659 = vadd.f32 %v1657, %v1658
        %v1660 = vmul.f32 %v1659, 0.03125
        %1661 = vst [vmem:[%s150] sm:$0x1] %v1660
        %s1662 = sand.u32 %s76, 1
        %s1663 = scalar_lea.sflag [#allocation3], %s1662
        %s1664 = sand.u32 %s76, 1
        %s1665 = scalar_lea.vmem [#allocation2], %s1664
        // Predicated region
        $region29: #{tpu_custom_call.1} parent=27 // pred_check
          %p1666 = pneg %p86
        $region30: #{tpu_custom_call.1} parent=27 // pred_check_branch
          %1668 = sbr.rel (%p1666) target = $region32
        $region31: #{tpu_custom_call.1} parent=27 // pred_region
          %s1670 = ssub.s32 16, 16
          %1671 = vsyncadd %s1663, %s1670
          %s1672 = smul.addr %s16, 16
          %s1673 = scalar_lea.hbm %s2, %s1672
          %s1675 = sshll.u32 %s1665, 4
          %s1676 = int_to_ptr.vmem [resolvable:$true] %s1675
          %1678 = dma.vmem_to_hbm [thread:$0]  %s1676, 16, %s1673, %s1663
        $region32: #{tpu_custom_call.1} parent=27 // pred_fallthru
          _
      $region28: #{tpu_custom_call.1} parent=5 // pred_fallthru
        _
      %p1679 = scmp.le.s32.totalorder 2, %s11
      // Predicated region
      $region33: #{tpu_custom_call.1} parent=5 // pred_check
        %p1680 = pneg %p1679
      $region34: #{tpu_custom_call.1} parent=5 // pred_check_branch
        %1682 = sbr.rel (%p1680) target = $region36
      $region35: #{tpu_custom_call.1} parent=5 // pred_region
        %s1683 = ssub.s32 %s11, 2
        // Predicated region
        $region37: #{tpu_custom_call.1} parent=35 // pred_check
          %p1684 = pneg %p92
        $region38: #{tpu_custom_call.1} parent=35 // pred_check_branch
          %1686 = sbr.rel (%p1684) target = $region40
        $region39: #{tpu_custom_call.1} parent=35 // pred_region
          %s1687 = sand.u32 %s77, 1
          %s1688 = scalar_lea.sflag [#allocation3], %s1687
          %s1689 = sand.u32 %s77, 1
          %s1690 = scalar_lea.vmem [#allocation2], %s1689
          %1691 = dma.done %s1688, 16
        $region40: #{tpu_custom_call.1} parent=35 // pred_fallthru
          _
      $region36: #{tpu_custom_call.1} parent=5 // pred_fallthru
        _
    $region6: #{tpu_custom_call.1} parent=1 // loop_footer
      %s15 = sadd.s32 1, %s11
    $region7: #{tpu_custom_call.1} parent=1 // loop_footer_branch
      %10 = sbr.rel target = $region3
    $region8: #{tpu_custom_call.1} parent=1 // loop_exit
      _
    %1692 = vsyncpa [#allocation3], 1
    %s1693 = scalar_lea.sflag [#allocation3], 1
    %1694 = vsyncpa %s1693, 1

</llo_original>
